<compile_context>
chip_gen: v5e
topology: v5e:2x2
jax: 0.10.0
libtpu: 0.0.40
codegen_flags: <defaults>
</compile_context>

<pallas_src>
import functools

import jax
import jax.numpy as jnp
import numpy as np
from jax.experimental import pallas as pl
from jax.experimental.pallas import tpu as pltpu


# ----------------------------------------------------------------------------
# Fused kernel: conv3x3+BN+LeakyReLU -> ConvTranspose2d+ReLU -> conv3x3+BN+LeakyReLU
# ----------------------------------------------------------------------------
def _decoder_block_kernel(xp_ref, a1_ref, b1_ref, ct_ref, bt_ref, es_ref, b2_ref,
                          o_ref, y1p_ref, y2p_ref,
                          *, NB, H, s, neg_slope, e_taps):
    f32 = jnp.float32
    M = NB * H

    def leaky(v):
        return jnp.where(v >= 0, v, neg_slope * v)

    def tap_cat(buf_ref, offs):
        """(NB, H+2, L) row-padded bf16 buffer -> (NB*H, len(offs)*L) tap-stacked lhs.

        Row m of the result is [buf[m+offs[0]], buf[m+offs[1]], ...] so ONE MXU
        matmul against the correspondingly stacked weight replaces one matmul per
        row tap (review item #1)."""
        L = buf_ref.shape[2]
        return jnp.concatenate(
            [buf_ref[:, o:o + H, :].reshape(M, L) for o in offs], axis=1)

    def store_padded(buf_ref, rows):
        """Write H data rows (cast once to bf16) and zero the 2 halo rows.

        Halo rows are re-zeroed every grid step (not only on program_id==0): with a
        "parallel" grid each TensorCore has private scratch and may never run step 0,
        so first-step-only init would be incorrect.  Cost: 4 tiny row stores."""
        L = buf_ref.shape[2]
        z = jnp.zeros((NB, 1, L), buf_ref.dtype)
        buf_ref[:, 0:1, :] = z
        buf_ref[:, H + 1:H + 2, :] = z
        buf_ref[:, 1:H + 1, :] = rows.reshape(NB, H, L).astype(buf_ref.dtype)

    # --- stage 1: Dropout(eval=identity) -> conv3x3 -> BN(folded) -> LeakyReLU ----
    #     single (M, 3*L0) @ (3*L0, L1) MXU matmul, f32 accumulation
    y1 = leaky(jnp.dot(tap_cat(xp_ref, (0, 1, 2)), a1_ref[...],
                       preferred_element_type=f32) + b1_ref[...])
    store_padded(y1p_ref, y1)

    # --- stage 2: ConvTranspose2d (sub-pixel phase decomposition) + bias + ReLU ----
    #     single (M, 3*L1) @ (3*L1, L2) MXU matmul
    y2 = jnp.maximum(jnp.dot(tap_cat(y1p_ref, (0, 1, 2)), ct_ref[...],
                             preferred_element_type=f32) + bt_ref[...], 0.0)
    store_padded(y2p_ref, y2)

    # --- stage 3: conv3x3 over the phase-interleaved upsampled map -> BN -> LeakyReLU
    #     one (M, 2*L2) @ (2*L2, L3) MXU matmul per output row phase; lane-dense store
    for qy in range(s):
        out = leaky(jnp.dot(tap_cat(y2p_ref, e_taps[qy]), es_ref[qy],
                            preferred_element_type=f32) + b2_ref[...])
        o_ref[0, qy] = out.astype(o_ref.dtype)


# ----------------------------------------------------------------------------
# Host-side parameter preparation (done once, off the hot path)
# ----------------------------------------------------------------------------
def _tconv_taps(r, s):
    """(input offset d, kernel index k) pairs contributing to output phase r of a
    ConvTranspose2d with kernel 2*s, stride s, padding s//2 (input index = block - d)."""
    p = s // 2
    ds = (1, 0) if (r + p) < s else (0, -1)
    return [(d, s * d + r + p) for d in ds]


def prepare_decoder_block(raw, H, W, scale=2, eps=1e-5, compute_dtype=jnp.bfloat16):
    """Fold BN into the weights and build lane-lowered ("banded") weight matrices,
    stacked along the contraction axis per row tap, so every conv/tconv stage is a
    single lane-dense matmul in the kernel.  Matrices are specialized to W."""
    s = int(scale)
    assert s >= 2 and s % 2 == 0, "sub-pixel decomposition assumes even scale (K=2s, pad=s//2)"

    w1 = np.asarray(raw["conv1_w"], np.float32)   # (3, 3, Cin, Cm)  HWIO
    wt = np.asarray(raw["tconv_w"], np.float32)   # (Cm, Cm, 2s, 2s) PyTorch layout
    w2 = np.asarray(raw["conv2_w"], np.float32)   # (3, 3, Cm, Co)   HWIO

    Cin, Cm = w1.shape[2], w1.shape[3]
    Co = w2.shape[3]
    assert wt.shape == (Cm, Cm, 2 * s, 2 * s) and w2.shape[2] == Cm

    L0, L1 = W * Cin, W * Cm
    L2, L3 = s * s * W * Cm, s * W * Co

    # folded BatchNorm (eval / running stats)
    s1 = np.asarray(raw["bn1_gamma"], np.float32) / np.sqrt(np.asarray(raw["bn1_var"], np.float32) + eps)
    b1 = np.asarray(raw["bn1_beta"], np.float32) - np.asarray(raw["bn1_mean"], np.float32) * s1
    s2 = np.asarray(raw["bn2_gamma"], np.float32) / np.sqrt(np.asarray(raw["bn2_var"], np.float32) + eps)
    b2 = np.asarray(raw["bn2_beta"], np.float32) - np.asarray(raw["bn2_mean"], np.float32) * s2
    bt = np.asarray(raw["tconv_b"], np.float32)

    # conv3x3 #1 lowered:  y1 = concat_kh(XP[m+kh]) @ A1s    (BN1 scale folded in)
    #   XP rows = vertically zero-padded x, lanes = w*Cin + ci; out lanes = w*Cm + co
    A1 = np.zeros((3, L0, L1), np.float32)
    for kh in range(3):
        for kw in range(3):
            for wo in range(W):
                wi = wo + kw - 1
                if 0 <= wi < W:
                    A1[kh, wi * Cin:(wi + 1) * Cin, wo * Cm:(wo + 1) * Cm] += w1[kh, kw]
    A1 *= np.tile(s1, W)[None, None, :]          # fold BN1 scale into output columns
    A1s = A1.reshape(3 * L0, L1)                 # stack taps along the contraction axis

    # ConvTranspose2d lowered (sub-pixel):  Y2 = concat_o(Y1P[m+o]) @ CTs
    #   Y2 lanes = ((ry*s + rx)*W + n)*Cm + c   (all s^2 phases of block-row m)
    CT = np.zeros((3, L1, L2), np.float32)
    for ry in range(s):
        for dy, ky in _tconv_taps(ry, s):
            o = 1 - dy                           # row offset into the padded Y1 buffer
            for rx in range(s):
                for dx, kx in _tconv_taps(rx, s):
                    for n in range(W):
                        wi = n - dx
                        if 0 <= wi < W:
                            col = ((ry * s + rx) * W + n) * Cm
                            CT[o, wi * Cm:(wi + 1) * Cm, col:col + Cm] += wt[:, :, ky, kx]
    CTs = CT.reshape(3 * L1, L2)

    # conv3x3 #2 lowered over phase-blocked Y2:  OUT[qy] = concat_o(Y2P[m+o]) @ Es[qy]
    #   output lanes = (s*n + qx)*Co + co  (true column order -> lane-dense store)
    #   Each output row phase touches at most 2 adjacent row taps -> stack only those.
    E = np.zeros((s, 3, L2, L3), np.float32)
    for qy in range(s):
        for kh in range(3):
            t = qy + kh - 1
            dm, py = t // s, t % s               # Python floor-div handles t = -1
            o = 1 + dm
            for qx in range(s):
                for kw in range(3):
                    u = qx + kw - 1
                    dn, px = u // s, u % s
                    for n in range(W):
                        wi = n + dn
                        if 0 <= wi < W:
                            row = ((py * s + px) * W + wi) * Cm
                            col = (s * n + qx) * Co
                            E[qy, o, row:row + Cm, col:col + Co] += w2[kh, kw]
    E *= np.tile(s2, s * W)[None, None, None, :]  # fold BN2 scale into output columns
    e_taps = tuple((0, 1) if qy == 0 else (1, 2) for qy in range(s))
    Es = np.stack([np.concatenate([E[qy, o] for o in e_taps[qy]], axis=0)
                   for qy in range(s)])           # (s, 2*L2, L3)

    return {
        "cfg": dict(H=H, W=W, Cin=Cin, Cm=Cm, Co=Co, s=s, e_taps=e_taps),
        "A1s": jnp.asarray(A1s, compute_dtype),
        "CTs": jnp.asarray(CTs, compute_dtype),
        "Es": jnp.asarray(Es, compute_dtype),
        "b1": jnp.asarray(np.tile(b1, W)[None, :], jnp.float32),
        "bt": jnp.asarray(np.tile(bt, s * s * W)[None, :], jnp.float32),
        "b2": jnp.asarray(np.tile(b2, s * W)[None, :], jnp.float32),
    }


# ----------------------------------------------------------------------------
# Public forward (NCHW in / NCHW out, like the PyTorch module)
# ----------------------------------------------------------------------------
def decoder_block_forward(prepared, x_nchw, groups=None):
    cfg = prepared["cfg"]
    H, W = cfg["H"], cfg["W"]
    Cin, Cm, Co, s = cfg["Cin"], cfg["Cm"], cfg["Co"], cfg["s"]
    N = x_nchw.shape[0]
    assert x_nchw.shape == (N, Cin, H, W), x_nchw.shape

    # 2-way "parallel" batch-group split (both v7x TensorCores busy); within a group
    # the batch is folded into the matmul M dimension (M = NB*H rows per step).
    if groups is None:
        groups = 2 if (N >= 2 and N % 2 == 0) else 1
    assert N % groups == 0
    NB = N // groups
    M = NB * H

    L0, L1 = W * Cin, W * Cm
    L2, L3 = s * s * W * Cm, s * W * Co

    # NCHW -> (N, H+2, W*Cin) zero-row-padded lane-major slab, pre-cast to bf16 so
    # the kernel never re-casts and the HBM->VMEM DMA bytes for x are halved.
    x = jnp.transpose(x_nchw, (0, 2, 3, 1)).reshape(N, H, L0)
    xp = jnp.pad(x, ((0, 0), (1, 1), (0, 0))).astype(jnp.bfloat16)

    kernel = functools.partial(
        _decoder_block_kernel, NB=NB, H=H, s=s, neg_slope=0.2, e_taps=cfg["e_taps"])

    out = pl.pallas_call(
        kernel,
        out_shape=jax.ShapeDtypeStruct((groups, s, M, L3), jnp.float32),
        grid=(groups,),
        in_specs=[
            pl.BlockSpec((NB, H + 2, L0), lambda g: (g, 0, 0)),   # pre-padded bf16 input
            pl.BlockSpec((3 * L0, L1), lambda g: (0, 0)),         # conv1 lowered (BN1 folded)
            pl.BlockSpec((1, L1), lambda g: (0, 0)),              # BN1 bias
            pl.BlockSpec((3 * L1, L2), lambda g: (0, 0)),         # tconv lowered
            pl.BlockSpec((1, L2), lambda g: (0, 0)),              # tconv bias
            pl.BlockSpec((s, 2 * L2, L3), lambda g: (0, 0, 0)),   # conv2 lowered (BN2 folded)
            pl.BlockSpec((1, L3), lambda g: (0, 0)),              # BN2 bias
        ],
        out_specs=pl.BlockSpec((1, s, M, L3), lambda g: (g, 0, 0, 0)),
        scratch_shapes=[
            pltpu.VMEM((NB, H + 2, L1), jnp.bfloat16),   # row-padded stage-1 output
            pltpu.VMEM((NB, H + 2, L2), jnp.bfloat16),   # row-padded (phase-blocked) tconv output
        ],
        compiler_params=pltpu.CompilerParams(
            dimension_semantics=("parallel",),
            vmem_limit_bytes=32 * 1024 * 1024),
    )(xp, prepared["A1s"], prepared["b1"], prepared["CTs"], prepared["bt"],
      prepared["Es"], prepared["b2"])

    # (G, s, NB*H, s*W*Co): row-phase-major rows, true-order columns -> NHWC -> NCHW
    y = out.reshape(groups, s, NB, H, s * W, Co)
    y = jnp.transpose(y, (0, 2, 3, 1, 4, 5)).reshape(N, s * H, s * W, Co)
    return jnp.transpose(y, (0, 3, 1, 2))


# ----------------------------------------------------------------------------
# Deterministic synthetic parameters (PyTorch layouts) and pure-XLA reference
# ----------------------------------------------------------------------------
def init_decoder_block(key, in_ch, out_ch, scale=2):
    ks = jax.random.split(key, 12)
    K = 2 * scale

    def n(k, shape, sd=0.1):
        return sd * jax.random.normal(k, shape, jnp.float32)

    return {
        "conv1_w": n(ks[0], (3, 3, in_ch, in_ch)),                 # HWIO
        "bn1_gamma": 1.0 + n(ks[1], (in_ch,)),
        "bn1_beta": n(ks[2], (in_ch,)),
        "bn1_mean": n(ks[3], (in_ch,)),
        "bn1_var": 1.0 + 0.5 * jax.random.uniform(ks[4], (in_ch,), jnp.float32),
        "tconv_w": n(ks[5], (in_ch, in_ch, K, K)),                 # PyTorch (Cin, Cout, kH, kW)
        "tconv_b": n(ks[6], (in_ch,)),
        "conv2_w": n(ks[7], (3, 3, in_ch, out_ch)),                # HWIO
        "bn2_gamma": 1.0 + n(ks[8], (out_ch,)),
        "bn2_beta": n(ks[9], (out_ch,)),
        "bn2_mean": n(ks[10], (out_ch,)),
        "bn2_var": 1.0 + 0.5 * jax.random.uniform(ks[11], (out_ch,), jnp.float32),
    }


def decoder_block_reference(raw, x_nchw, scale=2, eps=1e-5):
    """Pure-XLA f32 reference of the same eval-mode forward pass (for validation)."""
    dn = ("NHWC", "HWIO", "NHWC")
    hp = jax.lax.Precision.HIGHEST

    def conv_bn_lrelu(h, w, gamma, beta, mean, var):
        h = jax.lax.conv_general_dilated(h, w, (1, 1), [(1, 1), (1, 1)],
                                         dimension_numbers=dn, precision=hp)
        sc = gamma / jnp.sqrt(var + eps)
        h = h * sc + (beta - mean * sc)
        return jnp.where(h >= 0, h, 0.2 * h)

    x = jnp.transpose(x_nchw, (0, 2, 3, 1)).astype(jnp.float32)
    x = conv_bn_lrelu(x, raw["conv1_w"], raw["bn1_gamma"], raw["bn1_beta"],
                      raw["bn1_mean"], raw["bn1_var"])

    K, p = 2 * scale, scale // 2
    w_t = jnp.transpose(raw["tconv_w"][:, :, ::-1, ::-1], (2, 3, 0, 1))  # flipped -> HWIO
    x = jax.lax.conv_general_dilated(
        x, w_t, (1, 1), [(K - 1 - p, K - 1 - p)] * 2,
        lhs_dilation=(scale, scale), dimension_numbers=dn, precision=hp)
    x = jnp.maximum(x + raw["tconv_b"], 0.0)

    x = conv_bn_lrelu(x, raw["conv2_w"], raw["bn2_gamma"], raw["bn2_beta"],
                      raw["bn2_mean"], raw["bn2_var"])
    return jnp.transpose(x, (0, 3, 1, 2))


if __name__ == "__main__":
    in_ch, out_ch, scale = 4, 8, 2
    N, H, W = 2, 16, 16

    key = jax.random.PRNGKey(0)
    kx, kp = jax.random.split(key)
    x = jax.random.normal(kx, (N, in_ch, H, W), jnp.float32)
    raw = init_decoder_block(kp, in_ch, out_ch, scale)
    prepared = prepare_decoder_block(raw, H, W, scale=scale)

    fwd = jax.jit(lambda inp: decoder_block_forward(prepared, inp))
    y = jax.block_until_ready(fwd(x))

    assert y.shape == (N, out_ch, scale * H, scale * W), y.shape
    assert bool(jnp.all(jnp.isfinite(y)))

    # validate against the pure-XLA f32 reference of the same (eval-mode) forward pass
    # (bf16 lowered weights with folded BN scales + bf16 activations, f32 accumulation)
    y_ref = jax.block_until_ready(decoder_block_reference(raw, x, scale=scale))
    err = float(jnp.max(jnp.abs(y - y_ref)))
    assert err < 5e-2, f"max|err| vs reference = {err}"

    print("KERNEL_OK")
</pallas_src>

<mosaic_0001>
module attributes {stable_mosaic.version = 11 : i64} {
  func.func @_decoder_block_kernel(%arg0: i32, %arg1: memref<1x18x64xbf16, #tpu.memory_space<vmem>>, %arg2: memref<192x64xbf16, #tpu.memory_space<vmem>>, %arg3: memref<1x64xf32, #tpu.memory_space<vmem>>, %arg4: memref<192x256xbf16, #tpu.memory_space<vmem>>, %arg5: memref<1x256xf32, #tpu.memory_space<vmem>>, %arg6: memref<2x512x256xbf16, #tpu.memory_space<vmem>>, %arg7: memref<1x256xf32, #tpu.memory_space<vmem>>, %arg8: memref<1x2x16x256xf32, #tpu.memory_space<vmem>>, %arg9: memref<1x18x64xbf16, #tpu.memory_space<vmem>>, %arg10: memref<1x18x256xbf16, #tpu.memory_space<vmem>>) attributes {dimension_semantics = [#tpu.dimension_semantics<parallel>], iteration_bounds = array<i64: 2>, scalar_prefetch = 0 : i64, scratch_operands = 2 : i64, tpu.core_type = #tpu.core_type<tc>, window_params = [{transform_indices = @transform_0, window_bounds = array<i64: 1, 18, 64>}, {pipeline_mode = #tpu.pipeline_mode<synchronous>, transform_indices = @transform_1, window_bounds = array<i64: 192, 64>}, {pipeline_mode = #tpu.pipeline_mode<synchronous>, transform_indices = @transform_2, window_bounds = array<i64: 1, 64>}, {pipeline_mode = #tpu.pipeline_mode<synchronous>, transform_indices = @transform_3, window_bounds = array<i64: 192, 256>}, {pipeline_mode = #tpu.pipeline_mode<synchronous>, transform_indices = @transform_4, window_bounds = array<i64: 1, 256>}, {pipeline_mode = #tpu.pipeline_mode<synchronous>, transform_indices = @transform_5, window_bounds = array<i64: 2, 512, 256>}, {pipeline_mode = #tpu.pipeline_mode<synchronous>, transform_indices = @transform_6, window_bounds = array<i64: 1, 256>}, {transform_indices = @transform_7, window_bounds = array<i64: 1, 2, 16, 256>}]} {
    %c0 = arith.constant 0 : index
    %c0_0 = arith.constant 0 : index
    %c0_1 = arith.constant 0 : index
    %0 = vector.load %arg1[%c0, %c0_0, %c0_1] : memref<1x18x64xbf16, #tpu.memory_space<vmem>>, vector<1x16x64xbf16>
    %1 = vector.shape_cast %0 : vector<1x16x64xbf16> to vector<16x64xbf16>
    %c0_2 = arith.constant 0 : index
    %c1 = arith.constant 1 : index
    %c0_3 = arith.constant 0 : index
    %2 = vector.load %arg1[%c0_2, %c1, %c0_3] : memref<1x18x64xbf16, #tpu.memory_space<vmem>>, vector<1x16x64xbf16>
    %3 = vector.shape_cast %2 : vector<1x16x64xbf16> to vector<16x64xbf16>
    %c0_4 = arith.constant 0 : index
    %c2 = arith.constant 2 : index
    %c0_5 = arith.constant 0 : index
    %4 = vector.load %arg1[%c0_4, %c2, %c0_5] : memref<1x18x64xbf16, #tpu.memory_space<vmem>>, vector<1x16x64xbf16>
    %5 = vector.shape_cast %4 : vector<1x16x64xbf16> to vector<16x64xbf16>
    %6 = tpu.concatenate %1, %3, %5 in 1 : vector<16x64xbf16>, vector<16x64xbf16>, vector<16x64xbf16> -> vector<16x192xbf16>
    %c0_6 = arith.constant 0 : index
    %c0_7 = arith.constant 0 : index
    %7 = vector.load %arg2[%c0_6, %c0_7] : memref<192x64xbf16, #tpu.memory_space<vmem>>, vector<192x64xbf16>
    %cst = arith.constant dense<0.000000e+00> : vector<16x64xf32>
    %8 = tpu.matmul %6, %7, %cst {dimension_numbers = #tpu.dot_dimension_numbers<[1], [0], [0], [1], [0, 0, 1, 1], [], []>} : vector<16x192xbf16>, vector<192x64xbf16>, vector<16x64xf32> -> vector<16x64xf32>
    %c0_8 = arith.constant 0 : index
    %c0_9 = arith.constant 0 : index
    %9 = vector.load %arg3[%c0_8, %c0_9] : memref<1x64xf32, #tpu.memory_space<vmem>>, vector<1x64xf32>
    %10 = vector.broadcast %9 : vector<1x64xf32> to vector<16x64xf32>
    %11 = arith.addf %8, %10 : vector<16x64xf32>
    %cst_10 = arith.constant 0.000000e+00 : f32
    %12 = vector.broadcast %cst_10 : f32 to vector<16x64xf32>
    %13 = arith.cmpf oge, %11, %12 : vector<16x64xf32>
    %cst_11 = arith.constant 2.000000e-01 : f32
    %14 = vector.broadcast %cst_11 : f32 to vector<16x64xf32>
    %15 = arith.mulf %14, %11 : vector<16x64xf32>
    %16 = arith.select %13, %11, %15 : vector<16x64xi1>, vector<16x64xf32>
    %cst_12 = arith.constant 0.000000e+00 : bf16
    %17 = vector.broadcast %cst_12 : bf16 to vector<1x1x64xbf16>
    %c0_13 = arith.constant 0 : index
    %c0_14 = arith.constant 0 : index
    %c0_15 = arith.constant 0 : index
    %18 = vector.load %arg9[%c0_13, %c0_14, %c0_15] : memref<1x18x64xbf16, #tpu.memory_space<vmem>>, vector<1x1x64xbf16>
    tpu.vector_store %arg9[%c0_13, %c0_14, %c0_15], %17 {strides = array<i32>} : memref<1x18x64xbf16, #tpu.memory_space<vmem>>, vector<1x1x64xbf16>,
    %c0_16 = arith.constant 0 : index
    %c17 = arith.constant 17 : index
    %c0_17 = arith.constant 0 : index
    %19 = vector.load %arg9[%c0_16, %c17, %c0_17] : memref<1x18x64xbf16, #tpu.memory_space<vmem>>, vector<1x1x64xbf16>
    tpu.vector_store %arg9[%c0_16, %c17, %c0_17], %17 {strides = array<i32>} : memref<1x18x64xbf16, #tpu.memory_space<vmem>>, vector<1x1x64xbf16>,
    %20 = vector.shape_cast %16 : vector<16x64xf32> to vector<1x16x64xf32>
    %21 = arith.truncf %20 : vector<1x16x64xf32> to vector<1x16x64xbf16>
    %c0_18 = arith.constant 0 : index
    %c1_19 = arith.constant 1 : index
    %c0_20 = arith.constant 0 : index
    %22 = vector.load %arg9[%c0_18, %c1_19, %c0_20] : memref<1x18x64xbf16, #tpu.memory_space<vmem>>, vector<1x16x64xbf16>
    tpu.vector_store %arg9[%c0_18, %c1_19, %c0_20], %21 {strides = array<i32>} : memref<1x18x64xbf16, #tpu.memory_space<vmem>>, vector<1x16x64xbf16>,
    %c0_21 = arith.constant 0 : index
    %c0_22 = arith.constant 0 : index
    %c0_23 = arith.constant 0 : index
    %23 = vector.load %arg9[%c0_21, %c0_22, %c0_23] : memref<1x18x64xbf16, #tpu.memory_space<vmem>>, vector<1x16x64xbf16>
    %24 = vector.shape_cast %23 : vector<1x16x64xbf16> to vector<16x64xbf16>
    %c0_24 = arith.constant 0 : index
    %c1_25 = arith.constant 1 : index
    %c0_26 = arith.constant 0 : index
    %25 = vector.load %arg9[%c0_24, %c1_25, %c0_26] : memref<1x18x64xbf16, #tpu.memory_space<vmem>>, vector<1x16x64xbf16>
    %26 = vector.shape_cast %25 : vector<1x16x64xbf16> to vector<16x64xbf16>
    %c0_27 = arith.constant 0 : index
    %c2_28 = arith.constant 2 : index
    %c0_29 = arith.constant 0 : index
    %27 = vector.load %arg9[%c0_27, %c2_28, %c0_29] : memref<1x18x64xbf16, #tpu.memory_space<vmem>>, vector<1x16x64xbf16>
    %28 = vector.shape_cast %27 : vector<1x16x64xbf16> to vector<16x64xbf16>
    %29 = tpu.concatenate %24, %26, %28 in 1 : vector<16x64xbf16>, vector<16x64xbf16>, vector<16x64xbf16> -> vector<16x192xbf16>
    %c0_30 = arith.constant 0 : index
    %c0_31 = arith.constant 0 : index
    %30 = vector.load %arg4[%c0_30, %c0_31] : memref<192x256xbf16, #tpu.memory_space<vmem>>, vector<192x256xbf16>
    %cst_32 = arith.constant dense<0.000000e+00> : vector<16x256xf32>
    %31 = tpu.matmul %29, %30, %cst_32 {dimension_numbers = #tpu.dot_dimension_numbers<[1], [0], [0], [1], [0, 0, 1, 1], [], []>} : vector<16x192xbf16>, vector<192x256xbf16>, vector<16x256xf32> -> vector<16x256xf32>
    %c0_33 = arith.constant 0 : index
    %c0_34 = arith.constant 0 : index
    %32 = vector.load %arg5[%c0_33, %c0_34] : memref<1x256xf32, #tpu.memory_space<vmem>>, vector<1x256xf32>
    %33 = vector.broadcast %32 : vector<1x256xf32> to vector<16x256xf32>
    %34 = arith.addf %31, %33 : vector<16x256xf32>
    %cst_35 = arith.constant 0.000000e+00 : f32
    %35 = vector.broadcast %cst_35 : f32 to vector<16x256xf32>
    %36 = arith.maximumf %34, %35 : vector<16x256xf32>
    %cst_36 = arith.constant 0.000000e+00 : bf16
    %37 = vector.broadcast %cst_36 : bf16 to vector<1x1x256xbf16>
    %c0_37 = arith.constant 0 : index
    %c0_38 = arith.constant 0 : index
    %c0_39 = arith.constant 0 : index
    %38 = vector.load %arg10[%c0_37, %c0_38, %c0_39] : memref<1x18x256xbf16, #tpu.memory_space<vmem>>, vector<1x1x256xbf16>
    tpu.vector_store %arg10[%c0_37, %c0_38, %c0_39], %37 {strides = array<i32>} : memref<1x18x256xbf16, #tpu.memory_space<vmem>>, vector<1x1x256xbf16>,
    %c0_40 = arith.constant 0 : index
    %c17_41 = arith.constant 17 : index
    %c0_42 = arith.constant 0 : index
    %39 = vector.load %arg10[%c0_40, %c17_41, %c0_42] : memref<1x18x256xbf16, #tpu.memory_space<vmem>>, vector<1x1x256xbf16>
    tpu.vector_store %arg10[%c0_40, %c17_41, %c0_42], %37 {strides = array<i32>} : memref<1x18x256xbf16, #tpu.memory_space<vmem>>, vector<1x1x256xbf16>,
    %40 = vector.shape_cast %36 : vector<16x256xf32> to vector<1x16x256xf32>
    %41 = arith.truncf %40 : vector<1x16x256xf32> to vector<1x16x256xbf16>
    %c0_43 = arith.constant 0 : index
    %c1_44 = arith.constant 1 : index
    %c0_45 = arith.constant 0 : index
    %42 = vector.load %arg10[%c0_43, %c1_44, %c0_45] : memref<1x18x256xbf16, #tpu.memory_space<vmem>>, vector<1x16x256xbf16>
    tpu.vector_store %arg10[%c0_43, %c1_44, %c0_45], %41 {strides = array<i32>} : memref<1x18x256xbf16, #tpu.memory_space<vmem>>, vector<1x16x256xbf16>,
    %c0_46 = arith.constant 0 : index
    %c0_47 = arith.constant 0 : index
    %c0_48 = arith.constant 0 : index
    %43 = vector.load %arg10[%c0_46, %c0_47, %c0_48] : memref<1x18x256xbf16, #tpu.memory_space<vmem>>, vector<1x16x256xbf16>
    %44 = vector.shape_cast %43 : vector<1x16x256xbf16> to vector<16x256xbf16>
    %c0_49 = arith.constant 0 : index
    %c1_50 = arith.constant 1 : index
    %c0_51 = arith.constant 0 : index
    %45 = vector.load %arg10[%c0_49, %c1_50, %c0_51] : memref<1x18x256xbf16, #tpu.memory_space<vmem>>, vector<1x16x256xbf16>
    %46 = vector.shape_cast %45 : vector<1x16x256xbf16> to vector<16x256xbf16>
    %47 = tpu.concatenate %44, %46 in 1 : vector<16x256xbf16>, vector<16x256xbf16> -> vector<16x512xbf16>
    %c0_52 = arith.constant 0 : index
    %c0_53 = arith.constant 0 : index
    %c0_54 = arith.constant 0 : index
    %48 = vector.load %arg6[%c0_52, %c0_53, %c0_54] : memref<2x512x256xbf16, #tpu.memory_space<vmem>>, vector<1x512x256xbf16>
    %49 = vector.shape_cast %48 : vector<1x512x256xbf16> to vector<512x256xbf16>
    %cst_55 = arith.constant dense<0.000000e+00> : vector<16x256xf32>
    %50 = tpu.matmul %47, %49, %cst_55 {dimension_numbers = #tpu.dot_dimension_numbers<[1], [0], [0], [1], [0, 0, 1, 1], [], []>} : vector<16x512xbf16>, vector<512x256xbf16>, vector<16x256xf32> -> vector<16x256xf32>
    %c0_56 = arith.constant 0 : index
    %c0_57 = arith.constant 0 : index
    %51 = vector.load %arg7[%c0_56, %c0_57] : memref<1x256xf32, #tpu.memory_space<vmem>>, vector<1x256xf32>
    %52 = vector.broadcast %51 : vector<1x256xf32> to vector<16x256xf32>
    %53 = arith.addf %50, %52 : vector<16x256xf32>
    %cst_58 = arith.constant 0.000000e+00 : f32
    %54 = vector.broadcast %cst_58 : f32 to vector<16x256xf32>
    %55 = arith.cmpf oge, %53, %54 : vector<16x256xf32>
    %cst_59 = arith.constant 2.000000e-01 : f32
    %56 = vector.broadcast %cst_59 : f32 to vector<16x256xf32>
    %57 = arith.mulf %56, %53 : vector<16x256xf32>
    %58 = arith.select %55, %53, %57 : vector<16x256xi1>, vector<16x256xf32>
    %c0_60 = arith.constant 0 : index
    %c0_61 = arith.constant 0 : index
    %c0_62 = arith.constant 0 : index
    %c0_63 = arith.constant 0 : index
    %59 = vector.load %arg8[%c0_60, %c0_61, %c0_62, %c0_63] : memref<1x2x16x256xf32, #tpu.memory_space<vmem>>, vector<1x1x16x256xf32>
    %60 = vector.shape_cast %59 : vector<1x1x16x256xf32> to vector<16x256xf32>
    %61 = vector.shape_cast %58 : vector<16x256xf32> to vector<1x1x16x256xf32>
    tpu.vector_store %arg8[%c0_60, %c0_61, %c0_62, %c0_63], %61 {strides = array<i32>} : memref<1x2x16x256xf32, #tpu.memory_space<vmem>>, vector<1x1x16x256xf32>,
    %c0_64 = arith.constant 0 : index
    %c1_65 = arith.constant 1 : index
    %c0_66 = arith.constant 0 : index
    %62 = vector.load %arg10[%c0_64, %c1_65, %c0_66] : memref<1x18x256xbf16, #tpu.memory_space<vmem>>, vector<1x16x256xbf16>
    %63 = vector.shape_cast %62 : vector<1x16x256xbf16> to vector<16x256xbf16>
    %c0_67 = arith.constant 0 : index
    %c2_68 = arith.constant 2 : index
    %c0_69 = arith.constant 0 : index
    %64 = vector.load %arg10[%c0_67, %c2_68, %c0_69] : memref<1x18x256xbf16, #tpu.memory_space<vmem>>, vector<1x16x256xbf16>
    %65 = vector.shape_cast %64 : vector<1x16x256xbf16> to vector<16x256xbf16>
    %66 = tpu.concatenate %63, %65 in 1 : vector<16x256xbf16>, vector<16x256xbf16> -> vector<16x512xbf16>
    %c1_70 = arith.constant 1 : index
    %c0_71 = arith.constant 0 : index
    %c0_72 = arith.constant 0 : index
    %67 = vector.load %arg6[%c1_70, %c0_71, %c0_72] : memref<2x512x256xbf16, #tpu.memory_space<vmem>>, vector<1x512x256xbf16>
    %68 = vector.shape_cast %67 : vector<1x512x256xbf16> to vector<512x256xbf16>
    %cst_73 = arith.constant dense<0.000000e+00> : vector<16x256xf32>
    %69 = tpu.matmul %66, %68, %cst_73 {dimension_numbers = #tpu.dot_dimension_numbers<[1], [0], [0], [1], [0, 0, 1, 1], [], []>} : vector<16x512xbf16>, vector<512x256xbf16>, vector<16x256xf32> -> vector<16x256xf32>
    %c0_74 = arith.constant 0 : index
    %c0_75 = arith.constant 0 : index
    %70 = vector.load %arg7[%c0_74, %c0_75] : memref<1x256xf32, #tpu.memory_space<vmem>>, vector<1x256xf32>
    %71 = vector.broadcast %70 : vector<1x256xf32> to vector<16x256xf32>
    %72 = arith.addf %69, %71 : vector<16x256xf32>
    %cst_76 = arith.constant 0.000000e+00 : f32
    %73 = vector.broadcast %cst_76 : f32 to vector<16x256xf32>
    %74 = arith.cmpf oge, %72, %73 : vector<16x256xf32>
    %cst_77 = arith.constant 2.000000e-01 : f32
    %75 = vector.broadcast %cst_77 : f32 to vector<16x256xf32>
    %76 = arith.mulf %75, %72 : vector<16x256xf32>
    %77 = arith.select %74, %72, %76 : vector<16x256xi1>, vector<16x256xf32>
    %c0_78 = arith.constant 0 : index
    %c1_79 = arith.constant 1 : index
    %c0_80 = arith.constant 0 : index
    %c0_81 = arith.constant 0 : index
    %78 = vector.load %arg8[%c0_78, %c1_79, %c0_80, %c0_81] : memref<1x2x16x256xf32, #tpu.memory_space<vmem>>, vector<1x1x16x256xf32>
    %79 = vector.shape_cast %78 : vector<1x1x16x256xf32> to vector<16x256xf32>
    %80 = vector.shape_cast %77 : vector<16x256xf32> to vector<1x1x16x256xf32>
    tpu.vector_store %arg8[%c0_78, %c1_79, %c0_80, %c0_81], %80 {strides = array<i32>} : memref<1x2x16x256xf32, #tpu.memory_space<vmem>>, vector<1x1x16x256xf32>,
    return
  }
  func.func @transform_0(%arg0: i32) -> (i32, i32, i32) {
    %c0_i32 = arith.constant 0 : i32
    %c0_i32_0 = arith.constant 0 : i32
    %c0_i32_1 = arith.constant 0 : i32
    return %arg0, %c0_i32, %c0_i32_0 : i32, i32, i32
  }
  func.func @transform_1(%arg0: i32) -> (i32, i32) {
    %c0_i32 = arith.constant 0 : i32
    %c0_i32_0 = arith.constant 0 : i32
    %c0_i32_1 = arith.constant 0 : i32
    return %c0_i32, %c0_i32_0 : i32, i32
  }
  func.func @transform_2(%arg0: i32) -> (i32, i32) {
    %c0_i32 = arith.constant 0 : i32
    %c0_i32_0 = arith.constant 0 : i32
    %c0_i32_1 = arith.constant 0 : i32
    return %c0_i32, %c0_i32_0 : i32, i32
  }
  func.func @transform_3(%arg0: i32) -> (i32, i32) {
    %c0_i32 = arith.constant 0 : i32
    %c0_i32_0 = arith.constant 0 : i32
    %c0_i32_1 = arith.constant 0 : i32
    return %c0_i32, %c0_i32_0 : i32, i32
  }
  func.func @transform_4(%arg0: i32) -> (i32, i32) {
    %c0_i32 = arith.constant 0 : i32
    %c0_i32_0 = arith.constant 0 : i32
    %c0_i32_1 = arith.constant 0 : i32
    return %c0_i32, %c0_i32_0 : i32, i32
  }
  func.func @transform_5(%arg0: i32) -> (i32, i32, i32) {
    %c0_i32 = arith.constant 0 : i32
    %c0_i32_0 = arith.constant 0 : i32
    %c0_i32_1 = arith.constant 0 : i32
    %c0_i32_2 = arith.constant 0 : i32
    return %c0_i32, %c0_i32_0, %c0_i32_1 : i32, i32, i32
  }
  func.func @transform_6(%arg0: i32) -> (i32, i32) {
    %c0_i32 = arith.constant 0 : i32
    %c0_i32_0 = arith.constant 0 : i32
    %c0_i32_1 = arith.constant 0 : i32
    return %c0_i32, %c0_i32_0 : i32, i32
  }
  func.func @transform_7(%arg0: i32) -> (i32, i32, i32, i32) {
    %c0_i32 = arith.constant 0 : i32
    %c0_i32_0 = arith.constant 0 : i32
    %c0_i32_1 = arith.constant 0 : i32
    %c0_i32_2 = arith.constant 0 : i32
    return %arg0, %c0_i32, %c0_i32_0, %c0_i32_1 : i32, i32, i32, i32
  }
}

</mosaic_0001>

<llo_original>
// kernel: _lambda_.1
$region0: #{_lambda_.1}
  #allocation0 [shape = 'u32[]', space=smem, size = 0x4, offset = 0x4, fixed_abs, tag = 'smem constant byte address 0x4 - core index']
  #allocation1 [shape = 'u32[72,128]{1,0:T(1,128)}', space=vmem, size = 0x9000, scoped, tag = 'internal scratch']
  #allocation2 [shape = 'bf16[1,18,64]{2,1,0:T(8,128)(2,1)}', space=vmem, size = 0x1800, scoped, tag = 'scratch operand']
  #allocation3 [shape = 'bf16[1,18,256]{2,1,0:T(8,128)(2,1)}', space=vmem, size = 0x3000, scoped, tag = 'scratch operand']
  %s0 = inlined_call_operand.vmem [shape: bf16[2,18,64], index: 0, kind: input, shape index: {}]
  %s1 = inlined_call_operand.vmem [shape: bf16[192,64], index: 1, kind: input, shape index: {}]
  %s2 = inlined_call_operand.vmem [shape: f32[1,64], index: 2, kind: input, shape index: {}]
  %s3 = inlined_call_operand.vmem [shape: bf16[192,256], index: 3, kind: input, shape index: {}]
  %s4 = inlined_call_operand.vmem [shape: f32[1,256], index: 4, kind: input, shape index: {}]
  %s5 = inlined_call_operand.hbm [shape: bf16[2,512,256], index: 5, kind: input, shape index: {}]
  %s6 = inlined_call_operand.vmem [shape: f32[1,256], index: 6, kind: input, shape index: {}]
  %s7 = inlined_call_operand.vmem [shape: f32[2,2,16,256], index: 7, kind: output, shape index: {}]
  %s8 = sld [smem:[#allocation0]]
  $region65: #{_lambda_.1} parent=0
    _
  %s10 = ssub.s32 1, %s8
  %s11 = scalar_select 0, %s10, %s8
  $region1: #{_lambda_.1} parent=0
    #allocation4 [shape = 'u8[524288]{0}', space=vmem, size = 0x80000, scoped, tag = 'input window, operand 5, single buffered']
    #allocation5 [shape = 's32[2]{0}', space=sflag, size = 0x8, scoped, tag = 'scoped memory for _lambda_.1']
    %12 = vsyncpa [#allocation5], 0
    loop: start=0, step=1, limit=4
    $region2: #{_lambda_.1} parent=1 // loop_pre_header
      _
    $region3: #{_lambda_.1} parent=1 // loop_header
      %s14 = sphi 0, %s18
      %p15 = scmp.ge.s32.totalorder %s14, 4
      %s24 = sphi 0, %s26
      %s27 = sphi 0, %s24
      %s28 = sphi 0, %s27
      %s44 = sphi 0, %s28
      %s48 = sphi 0, %s48
      %s50 = sphi 0, %s48
      %s51 = sphi 0, %s50
      %s65 = sphi 0, %s51
      %s69 = sphi 0, %s69
      %s71 = sphi 0, %s69
      %s72 = sphi 0, %s71
      %s86 = sphi 0, %s72
      %s90 = sphi 0, %s90
      %s92 = sphi 0, %s90
      %s93 = sphi 0, %s92
      %s107 = sphi 0, %s93
      %s111 = sphi 0, %s111
      %s113 = sphi 0, %s111
      %s114 = sphi 0, %s113
      %s128 = sphi 0, %s114
      %s132 = sphi 0, %s132
      %s134 = sphi 0, %s132
      %s135 = sphi 0, %s134
      %s149 = sphi 0, %s135
      %s153 = sphi 0, %s153
      %s155 = sphi 0, %s153
      %s156 = sphi 0, %s155
      %s170 = sphi 0, %s156
      %s176 = sphi 0, %s178
      %s179 = sphi 0, %s176
      %s180 = sphi 0, %s179
      %s196 = sphi 0, %s180
    $region4: #{_lambda_.1} parent=1 // loop_header_branch
      %17 = sbr.rel (%p15) target = $region8
    $region5: #{_lambda_.1} parent=1 // loop_body
      %s19 = ssub.s32 %s14, 1
      %s20 = ssub.s32 %s14, 2
      %s21 = sadd.s32 %s14, 1
      %s22 = ssub.s32 %s14, %s21
      %p23 = scmp.eq.s32.totalorder %s22, 0
      %s25 = sadd.s32 %s24, 1
      %s26 = scalar_select %p23, %s24, %s25
      %p29 = pneg %p23
      %p30 = scmp.eq.s32.totalorder %s14, 1
      %p31 = por %p29, %p30
      %p32 = scmp.ne.s32.totalorder %s24, %s27
      %p33 = scmp.eq.s32.totalorder %s14, 0
      %p34 = por %p32, %p33
      %p35 = scmp.ne.s32.totalorder %s24, %s27
      %p36 = scmp.eq.s32.totalorder %s19, 1
      %p37 = por %p35, %p36
      %p38 = scmp.ne.s32.totalorder %s27, %s28
      %p39 = scmp.eq.s32.totalorder %s19, 0
      %p40 = por %p38, %p39
      %p41 = scmp.ne.s32.totalorder %s27, %s28
      %p42 = scmp.eq.s32.totalorder %s20, 1
      %p43 = por %p41, %p42
      %p45 = scmp.ne.s32.totalorder %s28, %s44
      %p46 = scmp.eq.s32.totalorder %s20, 0
      %p47 = por %p45, %p46
      %s49 = sadd.s32 %s48, 1
      %p52 = scmp.eq.s32.totalorder %s14, 1
      %p53 = scmp.ne.s32.totalorder %s48, %s50
      %p54 = scmp.eq.s32.totalorder %s14, 0
      %p55 = por %p53, %p54
      %p56 = scmp.ne.s32.totalorder %s48, %s50
      %p57 = scmp.eq.s32.totalorder %s19, 1
      %p58 = por %p56, %p57
      %p59 = scmp.ne.s32.totalorder %s50, %s51
      %p60 = scmp.eq.s32.totalorder %s19, 0
      %p61 = por %p59, %p60
      %p62 = scmp.ne.s32.totalorder %s50, %s51
      %p63 = scmp.eq.s32.totalorder %s20, 1
      %p64 = por %p62, %p63
      %p66 = scmp.ne.s32.totalorder %s51, %s65
      %p67 = scmp.eq.s32.totalorder %s20, 0
      %p68 = por %p66, %p67
      %s70 = sadd.s32 %s69, 1
      %p73 = scmp.eq.s32.totalorder %s14, 1
      %p74 = scmp.ne.s32.totalorder %s69, %s71
      %p75 = scmp.eq.s32.totalorder %s14, 0
      %p76 = por %p74, %p75
      %p77 = scmp.ne.s32.totalorder %s69, %s71
      %p78 = scmp.eq.s32.totalorder %s19, 1
      %p79 = por %p77, %p78
      %p80 = scmp.ne.s32.totalorder %s71, %s72
      %p81 = scmp.eq.s32.totalorder %s19, 0
      %p82 = por %p80, %p81
      %p83 = scmp.ne.s32.totalorder %s71, %s72
      %p84 = scmp.eq.s32.totalorder %s20, 1
      %p85 = por %p83, %p84
      %p87 = scmp.ne.s32.totalorder %s72, %s86
      %p88 = scmp.eq.s32.totalorder %s20, 0
      %p89 = por %p87, %p88
      %s91 = sadd.s32 %s90, 1
      %p94 = scmp.eq.s32.totalorder %s14, 1
      %p95 = scmp.ne.s32.totalorder %s90, %s92
      %p96 = scmp.eq.s32.totalorder %s14, 0
      %p97 = por %p95, %p96
      %p98 = scmp.ne.s32.totalorder %s90, %s92
      %p99 = scmp.eq.s32.totalorder %s19, 1
      %p100 = por %p98, %p99
      %p101 = scmp.ne.s32.totalorder %s92, %s93
      %p102 = scmp.eq.s32.totalorder %s19, 0
      %p103 = por %p101, %p102
      %p104 = scmp.ne.s32.totalorder %s92, %s93
      %p105 = scmp.eq.s32.totalorder %s20, 1
      %p106 = por %p104, %p105
      %p108 = scmp.ne.s32.totalorder %s93, %s107
      %p109 = scmp.eq.s32.totalorder %s20, 0
      %p110 = por %p108, %p109
      %s112 = sadd.s32 %s111, 1
      %p115 = scmp.eq.s32.totalorder %s14, 1
      %p116 = scmp.ne.s32.totalorder %s111, %s113
      %p117 = scmp.eq.s32.totalorder %s14, 0
      %p118 = por %p116, %p117
      %p119 = scmp.ne.s32.totalorder %s111, %s113
      %p120 = scmp.eq.s32.totalorder %s19, 1
      %p121 = por %p119, %p120
      %p122 = scmp.ne.s32.totalorder %s113, %s114
      %p123 = scmp.eq.s32.totalorder %s19, 0
      %p124 = por %p122, %p123
      %p125 = scmp.ne.s32.totalorder %s113, %s114
      %p126 = scmp.eq.s32.totalorder %s20, 1
      %p127 = por %p125, %p126
      %p129 = scmp.ne.s32.totalorder %s114, %s128
      %p130 = scmp.eq.s32.totalorder %s20, 0
      %p131 = por %p129, %p130
      %s133 = sadd.s32 %s132, 1
      %p136 = scmp.eq.s32.totalorder %s14, 1
      %p137 = scmp.ne.s32.totalorder %s132, %s134
      %p138 = scmp.eq.s32.totalorder %s14, 0
      %p139 = por %p137, %p138
      %p140 = scmp.ne.s32.totalorder %s132, %s134
      %p141 = scmp.eq.s32.totalorder %s19, 1
      %p142 = por %p140, %p141
      %p143 = scmp.ne.s32.totalorder %s134, %s135
      %p144 = scmp.eq.s32.totalorder %s19, 0
      %p145 = por %p143, %p144
      %p146 = scmp.ne.s32.totalorder %s134, %s135
      %p147 = scmp.eq.s32.totalorder %s20, 1
      %p148 = por %p146, %p147
      %p150 = scmp.ne.s32.totalorder %s135, %s149
      %p151 = scmp.eq.s32.totalorder %s20, 0
      %p152 = por %p150, %p151
      %s154 = sadd.s32 %s153, 1
      %p157 = scmp.eq.s32.totalorder %s14, 1
      %p158 = scmp.ne.s32.totalorder %s153, %s155
      %p159 = scmp.eq.s32.totalorder %s14, 0
      %p160 = por %p158, %p159
      %p161 = scmp.ne.s32.totalorder %s153, %s155
      %p162 = scmp.eq.s32.totalorder %s19, 1
      %p163 = por %p161, %p162
      %p164 = scmp.ne.s32.totalorder %s155, %s156
      %p165 = scmp.eq.s32.totalorder %s19, 0
      %p166 = por %p164, %p165
      %p167 = scmp.ne.s32.totalorder %s155, %s156
      %p168 = scmp.eq.s32.totalorder %s20, 1
      %p169 = por %p167, %p168
      %p171 = scmp.ne.s32.totalorder %s156, %s170
      %p172 = scmp.eq.s32.totalorder %s20, 0
      %p173 = por %p171, %p172
      %s174 = ssub.s32 %s14, %s21
      %p175 = scmp.eq.s32.totalorder %s174, 0
      %s177 = sadd.s32 %s176, 1
      %s178 = scalar_select %p175, %s176, %s177
      %p181 = pneg %p175
      %p182 = scmp.eq.s32.totalorder %s14, 1
      %p183 = por %p181, %p182
      %p184 = scmp.ne.s32.totalorder %s176, %s179
      %p185 = scmp.eq.s32.totalorder %s14, 0
      %p186 = por %p184, %p185
      %p187 = scmp.ne.s32.totalorder %s176, %s179
      %p188 = scmp.eq.s32.totalorder %s19, 1
      %p189 = por %p187, %p188
      %p190 = scmp.ne.s32.totalorder %s179, %s180
      %p191 = scmp.eq.s32.totalorder %s19, 0
      %p192 = por %p190, %p191
      %p193 = scmp.ne.s32.totalorder %s179, %s180
      %p194 = scmp.eq.s32.totalorder %s20, 1
      %p195 = por %p193, %p194
      %p197 = scmp.ne.s32.totalorder %s180, %s196
      %p198 = scmp.eq.s32.totalorder %s20, 0
      %p199 = por %p197, %p198
      %p200 = scmp.le.s32.totalorder 1, %s14
      %p201 = scmp.lt.s32.totalorder %s14, 3
      %p202 = pnand %p200, %p201
      %p203 = pneg %p202
      // Predicated region
      $region9: #{_lambda_.1} parent=5 // pred_check
        _
      $region10: #{_lambda_.1} parent=5 // pred_check_branch
        %205 = sbr.rel (%p202) target = $region12
      $region11: #{_lambda_.1} parent=5 // pred_region
        %s206 = ssub.s32 %s14, 1
        // Predicated region
        $region13: #{_lambda_.1} parent=11 // pred_check
          %p207 = pneg %p61
        $region14: #{_lambda_.1} parent=11 // pred_check_branch
          %209 = sbr.rel (%p207) target = $region16
        $region15: #{_lambda_.1} parent=11 // pred_region
          _
        $region16: #{_lambda_.1} parent=11 // pred_fallthru
          _
        // Predicated region
        $region17: #{_lambda_.1} parent=11 // pred_check
          %p210 = pneg %p82
        $region18: #{_lambda_.1} parent=11 // pred_check_branch
          %212 = sbr.rel (%p210) target = $region20
        $region19: #{_lambda_.1} parent=11 // pred_region
          _
        $region20: #{_lambda_.1} parent=11 // pred_fallthru
          _
        // Predicated region
        $region21: #{_lambda_.1} parent=11 // pred_check
          %p213 = pneg %p103
        $region22: #{_lambda_.1} parent=11 // pred_check_branch
          %215 = sbr.rel (%p213) target = $region24
        $region23: #{_lambda_.1} parent=11 // pred_region
          _
        $region24: #{_lambda_.1} parent=11 // pred_fallthru
          _
        // Predicated region
        $region25: #{_lambda_.1} parent=11 // pred_check
          %p216 = pneg %p124
        $region26: #{_lambda_.1} parent=11 // pred_check_branch
          %218 = sbr.rel (%p216) target = $region28
        $region27: #{_lambda_.1} parent=11 // pred_region
          _
        $region28: #{_lambda_.1} parent=11 // pred_fallthru
          _
        // Predicated region
        $region29: #{_lambda_.1} parent=11 // pred_check
          %p219 = pneg %p145
        $region30: #{_lambda_.1} parent=11 // pred_check_branch
          %221 = sbr.rel (%p219) target = $region32
        $region31: #{_lambda_.1} parent=11 // pred_region
          %223 = vsyncadd [#allocation5], 0
          %s224 = sshll.u32 %s5, 4
          %s225 = int_to_ptr.hbm [resolvable:$true] %s224
          %s226 = sshll.u32 [#allocation4], 4
          %s227 = int_to_ptr.vmem [resolvable:$true] %s226
          %232 = dma.hbm_to_vmem [thread:$0]  %s225, 16384, %s227, [#allocation5], 128, 128, 8
        $region32: #{_lambda_.1} parent=11 // pred_fallthru
          _
        // Predicated region
        $region33: #{_lambda_.1} parent=11 // pred_check
          %p233 = pneg %p166
        $region34: #{_lambda_.1} parent=11 // pred_check_branch
          %235 = sbr.rel (%p233) target = $region36
        $region35: #{_lambda_.1} parent=11 // pred_region
          _
        $region36: #{_lambda_.1} parent=11 // pred_fallthru
          _
      $region12: #{_lambda_.1} parent=5 // pred_fallthru
        _
      %p236 = scmp.lt.s32.totalorder %s14, 2
      // Predicated region
      $region37: #{_lambda_.1} parent=5 // pred_check
        %p237 = pneg %p236
      $region38: #{_lambda_.1} parent=5 // pred_check_branch
        %239 = sbr.rel (%p237) target = $region40
      $region39: #{_lambda_.1} parent=5 // pred_region
        // Predicated region
        $region41: #{_lambda_.1} parent=39 // pred_check
          %p240 = pneg %p34
        $region42: #{_lambda_.1} parent=39 // pred_check_branch
          %242 = sbr.rel (%p240) target = $region44
        $region43: #{_lambda_.1} parent=39 // pred_region
          %p243 = scmp.lt.s32.totalorder %s14, 1
          %s244 = scalar_select %p243, %s14, 1
          %s245 = smul.addr %s244, 3
          %s246 = smul.addr %s245, 4
          %s247 = scalar_lea.vmem %s0, %s246
        $region44: #{_lambda_.1} parent=39 // pred_fallthru
          _
      $region40: #{_lambda_.1} parent=5 // pred_fallthru
        _
      %p248 = scmp.le.s32.totalorder 1, %s14
      %p249 = scmp.lt.s32.totalorder %s14, 3
      %p250 = pnand %p248, %p249
      %p251 = pneg %p250
      // Predicated region
      $region45: #{_lambda_.1} parent=5 // pred_check
        _
      $region46: #{_lambda_.1} parent=5 // pred_check_branch
        %253 = sbr.rel (%p250) target = $region48
      $region47: #{_lambda_.1} parent=5 // pred_region
        %s254 = ssub.s32 %s14, 1
        // Predicated region
        $region49: #{_lambda_.1} parent=47 // pred_check
          %p255 = pneg %p145
        $region50: #{_lambda_.1} parent=47 // pred_check_branch
          %257 = sbr.rel (%p255) target = $region52
        $region51: #{_lambda_.1} parent=47 // pred_region
          %259 = dma.done [#allocation5], 16384
        $region52: #{_lambda_.1} parent=47 // pred_fallthru
          _
        %p260 = scmp.lt.s32.totalorder %s19, 1
        %s261 = scalar_select %p260, %s19, 1
        %s262 = smul.addr %s261, 3
        %s263 = smul.addr %s262, 4
        %s264 = scalar_lea.vmem %s0, %s263
        %p265 = pneg %p40
        %p266 = pneg %p37
        %p267 = pneg %p61
        %p268 = pneg %p58
        %p269 = pneg %p82
        %p270 = pneg %p79
        %p271 = pneg %p103
        %p272 = pneg %p100
        %p273 = pneg %p124
        %p274 = pneg %p121
        %p275 = pneg %p145
        %p276 = pneg %p142
        %p277 = pneg %p166
        %p278 = pneg %p163
        %p279 = pneg %p192
        %p280 = pneg %p189
        %p281 = scmp.lt.s32.totalorder %s19, 1
        %s282 = scalar_select %p281, %s19, 1
        %s283 = smul.addr %s282, 8
        %s284 = smul.addr %s283, 8
        %s285 = scalar_lea.vmem %s7, %s284
        %p286 = scmp.lt.s32.totalorder %s19, 1
        %s287 = scalar_select %p286, %s19, 1
        %s288 = smul.addr %s287, 3
        %s289 = smul.addr %s288, 4
        %s290 = scalar_lea.vmem %s0, %s289
        %p291 = scmp.lt.s32.totalorder %s19, 1
        %s292 = scalar_select %p291, %s19, 1
        %s293 = smul.addr %s292, 8
        %s294 = smul.addr %s293, 8
        %s295 = scalar_lea.vmem %s7, %s294
        %v297 = vld [vmem:[%s290] sm:$0xf]
        %v298 = vld [vmem:[%s290 + $0x4] sm:$0xf]
        %v299 = vld [vmem:[%s290 + $0x8] sm:$0x1]
        %v300 = vld [vmem:[%s290] sm:$0xe]
        %v303 = vunpack.c.l.b16 %v297
        %v304 = vunpack.c.l.b16 %v298
        %v305 = vpack.c.b16 %v304, %v303
        %v307 = vunpack.c.l.b16 %v299
        %v308 = vpack.c.b16 %v307, %v307
        %vm309 = vsmask.f32 7424
        %v311 = vshrl.u32 %v305, 16
        %v313 = vshll.u32 %v305, 16
        %v315 = vrot.slane %v313, 1
        %v316 = vor.u32 %v311, %v315
        %v318 = vshll.u32 %v308, 16
        %v320 = vrot.slane %v318, 1
        %v321 = vsel %vm309, %v316, %v320
        %322 = vrot.lane.b32.xlu0 %v321, 64
        %v323 = vpop.permute.xlu0 %322
        %v325 = vunpack.c.l.b16 %v300
        %v326 = vpack.c.b16 %v304, %v325
        %vm327 = vcmask 1046528
        %v328 = vrot.slane %v326, 1
        %v329 = vrot.slane %v308, 1
        %v330 = vsel %vm327, %v328, %v329
        %vm331 = vcmask 523264
        %v333 = vsel %vm331, %v305, %v323
        %v335 = vld [vmem:[%s1] sm:$0xf]
        %v336 = vld [vmem:[%s1 + $0x4] sm:$0xf]
        %v337 = vld [vmem:[%s1 + $0x8] sm:$0xf]
        %v338 = vld [vmem:[%s1 + $0xc] sm:$0xf]
        %v339 = vld [vmem:[%s1 + $0x10] sm:$0xf]
        %v340 = vld [vmem:[%s1 + $0x14] sm:$0xf]
        %v341 = vld [vmem:[%s1 + $0x18] sm:$0xf]
        %v342 = vld [vmem:[%s1 + $0x1c] sm:$0xf]
        %v343 = vld [vmem:[%s1 + $0x20] sm:$0xf]
        %v344 = vld [vmem:[%s1 + $0x24] sm:$0xf]
        %v345 = vld [vmem:[%s1 + $0x28] sm:$0xf]
        %v346 = vld [vmem:[%s1 + $0x2c] sm:$0xf]
        %v347 = vld [vmem:[%s1 + $0x30] sm:$0xf]
        %v348 = vld [vmem:[%s1 + $0x34] sm:$0xf]
        %v349 = vld [vmem:[%s1 + $0x38] sm:$0xf]
        %v350 = vld [vmem:[%s1 + $0x3c] sm:$0xf]
        %v351 = vld [vmem:[%s1 + $0x40] sm:$0xf]
        %v352 = vld [vmem:[%s1 + $0x44] sm:$0xf]
        %v353 = vld [vmem:[%s1 + $0x48] sm:$0xf]
        %v354 = vld [vmem:[%s1 + $0x4c] sm:$0xf]
        %v355 = vld [vmem:[%s1 + $0x50] sm:$0xf]
        %v356 = vld [vmem:[%s1 + $0x54] sm:$0xf]
        %v357 = vld [vmem:[%s1 + $0x58] sm:$0xf]
        %v358 = vld [vmem:[%s1 + $0x5c] sm:$0xf]
        %v359 = vld [vmem:[%s2] sm:$0x1]
        %v361 = vperm.slane %v359, 0
        %v387 = vunpack.c.l.b16 %v335
        %v388 = vunpack.c.l.b16 %v336
        %v389 = vunpack.c.l.b16 %v337
        %v390 = vunpack.c.l.b16 %v338
        %v391 = vunpack.c.l.b16 %v339
        %v392 = vunpack.c.l.b16 %v340
        %v393 = vunpack.c.l.b16 %v341
        %v394 = vunpack.c.l.b16 %v342
        %v395 = vunpack.c.l.b16 %v343
        %v396 = vunpack.c.l.b16 %v344
        %v397 = vunpack.c.l.b16 %v345
        %v398 = vunpack.c.l.b16 %v346
        %v399 = vunpack.c.l.b16 %v347
        %v400 = vunpack.c.l.b16 %v348
        %v401 = vunpack.c.l.b16 %v349
        %v402 = vunpack.c.l.b16 %v350
        %v403 = vunpack.c.l.b16 %v351
        %v404 = vunpack.c.l.b16 %v352
        %v405 = vunpack.c.l.b16 %v353
        %v406 = vunpack.c.l.b16 %v354
        %v407 = vunpack.c.l.b16 %v355
        %v408 = vunpack.c.l.b16 %v356
        %v409 = vunpack.c.l.b16 %v357
        %v410 = vunpack.c.l.b16 %v358
        %v411 = vpack.c.b16 %v388, %v387
        %v412 = vpack.c.b16 %v390, %v389
        %v413 = vpack.c.b16 %v392, %v391
        %v414 = vpack.c.b16 %v394, %v393
        %v415 = vpack.c.b16 %v396, %v395
        %v416 = vpack.c.b16 %v398, %v397
        %v417 = vpack.c.b16 %v400, %v399
        %v418 = vpack.c.b16 %v402, %v401
        %v419 = vpack.c.b16 %v404, %v403
        %v420 = vpack.c.b16 %v406, %v405
        %v421 = vpack.c.b16 %v408, %v407
        %v422 = vpack.c.b16 %v410, %v409
        %v436 = vsel %vm331, %v330, 0
        %438 = vmatpush.bf16.msra.mxu0 %v418
        %439 = vmatpush.bf16.msra.mxu0 %v417
        %440 = vmatpush.bf16.msra.mxu0 %v416
        %441 = vmatpush.bf16.msra.mxu0 %v415
        %442 = vmatpush.bf16.msra.mxu0 %v414
        %443 = vmatpush.bf16.msra.mxu0 %v413
        %444 = vmatpush.bf16.msra.mxu0 %v412
        %445 = vmatpush.bf16.msra.mxu0 %v411
        %446 = vmatmul.bf16.gmra.mxu0 %v333
        %v447 = vpop.f32.mrf.mxu0
        %v448 = vadd.f32 %v361, %v447
        %v449 = vpop.f32.mrf.mxu0
        %v450 = vadd.f32 %v361, %v449
        %451 = vdwg.mxu0
        %452 = vmatpush.bf16.msra.mxu0 0
        %453 = vmatpush.bf16.msra.mxu0 0
        %454 = vmatpush.bf16.msra.mxu0 0
        %455 = vmatpush.bf16.msra.mxu0 0
        %456 = vmatpush.bf16.msra.mxu0 %v422
        %457 = vmatpush.bf16.msra.mxu0 %v421
        %458 = vmatpush.bf16.msra.mxu0 %v420
        %459 = vmatpush.bf16.msra.mxu0 %v419
        %460 = vmatmul.bf16.gmra.mxu0 %v436
        %v461 = vpop.f32.mrf.mxu0
        %v462 = vadd.f32 %v448, %v461
        %v463 = vpop.f32.mrf.mxu0
        %v464 = vadd.f32 %v450, %v463
        %465 = vdwg.mxu0
        %vm466 = vcmp.ge.f32.partialorder %v462, 0.0
        %vm467 = vcmp.ge.f32.partialorder %v464, 0.0
        %v468 = vmul.f32 %v462, 0.2
        %v469 = vmul.f32 %v464, 0.2
        %v470 = vsel %vm466, %v462, %v468
        %v471 = vsel %vm467, %v464, %v469
        %vm472 = vcmask 516096
        %vm473 = vsmask.f32 256
        %vm474 = vmand %vm472, %vm473
        %v475 = vld [vmem:[#allocation2] sm:$0x1]
        %v476 = vsel %vm474, 0, %v475
        %477 = vst [vmem:[#allocation2] sm:$0x1] %v476
        %vm478 = vsmask.f32 7938
        %vm479 = vmand %vm472, %vm478
        %v480 = vld [vmem:[#allocation2 + $0x8] sm:$0x1]
        %v481 = vsel %vm479, 0, %v480
        %482 = vst [vmem:[#allocation2 + $0x8] sm:$0x1] %v481
        %v483 = vpack.c.bf16 %v470, %v470
        %v484 = vpack.c.bf16 %v471, %v471
        %vm485 = vsmask.f32 4368
        %vm486 = vmor %vm473, %vm485
        %v488 = vshrl.u32 %v483, 16
        %v490 = vrot.slane %v488, 7
        %v491 = vshll.u32 %v483, 16
        %v493 = vor.u32 %v490, %v491
        %v494 = vrot.slane %v490, 4
        %v496 = vshrl.u32 %v484, 16
        %v498 = vrot.slane %v496, 7
        %v499 = vshll.u32 %v484, 16
        %v501 = vor.u32 %v498, %v499
        %v502 = vsel %vm486, %v494, %v501
        %v503 = vrot.slane %v498, 4
        %vm507 = vcmask 519168
        %vm508 = vmand %vm507, %vm478
        %v509 = vld [vmem:[#allocation2] sm:$0xf]
        %v510 = vsel %vm508, %v493, %v509
        %511 = vst [vmem:[#allocation2] sm:$0xf] %v510
        %vm512 = vcmask 519168
        %513 = vst.msk [vmem:[#allocation2 + $0x4] sm:$0xf] %vm512, %v502
        %v514 = vld [vmem:[#allocation2 + $0x8] sm:$0x1]
        %v515 = vsel %vm474, %v503, %v514
        %516 = vst [vmem:[#allocation2 + $0x8] sm:$0x1] %v515
        %v517 = vld [vmem:[#allocation2] sm:$0xf]
        %v518 = vld [vmem:[#allocation2 + $0x4] sm:$0xf]
        %v519 = vld [vmem:[#allocation2 + $0x8] sm:$0x1]
        %v520 = vld [vmem:[#allocation2] sm:$0xe]
        %v523 = vunpack.c.l.b16 %v517
        %v524 = vunpack.c.l.b16 %v518
        %v525 = vpack.c.b16 %v524, %v523
        %v527 = vunpack.c.l.b16 %v519
        %v528 = vpack.c.b16 %v527, %v527
        %v530 = vshrl.u32 %v525, 16
        %v532 = vshll.u32 %v525, 16
        %v534 = vrot.slane %v532, 1
        %v535 = vor.u32 %v530, %v534
        %v537 = vshll.u32 %v528, 16
        %v539 = vrot.slane %v537, 1
        %v540 = vsel %vm309, %v535, %v539
        %541 = vrot.lane.b32.xlu0 %v540, 64
        %v542 = vpop.permute.xlu0 %541
        %v544 = vunpack.c.l.b16 %v520
        %v545 = vpack.c.b16 %v524, %v544
        %v546 = vrot.slane %v545, 1
        %v547 = vrot.slane %v528, 1
        %v548 = vsel %vm327, %v546, %v547
        %v550 = vsel %vm331, %v525, %v542
        %v552 = vld [vmem:[%s3] sm:$0xff]
        %v553 = vld [vmem:[%s3 + $0x8] sm:$0xff]
        %v554 = vld [vmem:[%s3 + $0x10] sm:$0xff]
        %v555 = vld [vmem:[%s3 + $0x18] sm:$0xff]
        %v556 = vld [vmem:[%s3 + $0x20] sm:$0xff]
        %v557 = vld [vmem:[%s3 + $0x28] sm:$0xff]
        %v558 = vld [vmem:[%s3 + $0x30] sm:$0xff]
        %v559 = vld [vmem:[%s3 + $0x38] sm:$0xff]
        %v560 = vld [vmem:[%s3 + $0x40] sm:$0xff]
        %v561 = vld [vmem:[%s3 + $0x48] sm:$0xff]
        %v562 = vld [vmem:[%s3 + $0x50] sm:$0xff]
        %v563 = vld [vmem:[%s3 + $0x58] sm:$0xff]
        %v564 = vld [vmem:[%s3 + $0x60] sm:$0xff]
        %v565 = vld [vmem:[%s3 + $0x68] sm:$0xff]
        %v566 = vld [vmem:[%s3 + $0x70] sm:$0xff]
        %v567 = vld [vmem:[%s3 + $0x78] sm:$0xff]
        %v568 = vld [vmem:[%s3 + $0x80] sm:$0xff]
        %v569 = vld [vmem:[%s3 + $0x88] sm:$0xff]
        %v570 = vld [vmem:[%s3 + $0x90] sm:$0xff]
        %v571 = vld [vmem:[%s3 + $0x98] sm:$0xff]
        %v572 = vld [vmem:[%s3 + $0xa0] sm:$0xff]
        %v573 = vld [vmem:[%s3 + $0xa8] sm:$0xff]
        %v574 = vld [vmem:[%s3 + $0xb0] sm:$0xff]
        %v575 = vld [vmem:[%s3 + $0xb8] sm:$0xff]
        %v576 = vld [vmem:[%s4] sm:$0x3]
        %v578 = vperm.slane %v576, 0
        %v579 = vperm.slane %v576, 1
        %v606 = vunpack.c.l.b16 %v552
        %v607 = vunpack.c.h.b16 %v552
        %v608 = vunpack.c.l.b16 %v553
        %v609 = vunpack.c.h.b16 %v553
        %v610 = vunpack.c.l.b16 %v554
        %v611 = vunpack.c.h.b16 %v554
        %v612 = vunpack.c.l.b16 %v555
        %v613 = vunpack.c.h.b16 %v555
        %v614 = vunpack.c.l.b16 %v556
        %v615 = vunpack.c.h.b16 %v556
        %v616 = vunpack.c.l.b16 %v557
        %v617 = vunpack.c.h.b16 %v557
        %v618 = vunpack.c.l.b16 %v558
        %v619 = vunpack.c.h.b16 %v558
        %v620 = vunpack.c.l.b16 %v559
        %v621 = vunpack.c.h.b16 %v559
        %v622 = vunpack.c.l.b16 %v560
        %v623 = vunpack.c.h.b16 %v560
        %v624 = vunpack.c.l.b16 %v561
        %v625 = vunpack.c.h.b16 %v561
        %v626 = vunpack.c.l.b16 %v562
        %v627 = vunpack.c.h.b16 %v562
        %v628 = vunpack.c.l.b16 %v563
        %v629 = vunpack.c.h.b16 %v563
        %v630 = vunpack.c.l.b16 %v564
        %v631 = vunpack.c.h.b16 %v564
        %v632 = vunpack.c.l.b16 %v565
        %v633 = vunpack.c.h.b16 %v565
        %v634 = vunpack.c.l.b16 %v566
        %v635 = vunpack.c.h.b16 %v566
        %v636 = vunpack.c.l.b16 %v567
        %v637 = vunpack.c.h.b16 %v567
        %v638 = vunpack.c.l.b16 %v568
        %v639 = vunpack.c.h.b16 %v568
        %v640 = vunpack.c.l.b16 %v569
        %v641 = vunpack.c.h.b16 %v569
        %v642 = vunpack.c.l.b16 %v570
        %v643 = vunpack.c.h.b16 %v570
        %v644 = vunpack.c.l.b16 %v571
        %v645 = vunpack.c.h.b16 %v571
        %v646 = vunpack.c.l.b16 %v572
        %v647 = vunpack.c.h.b16 %v572
        %v648 = vunpack.c.l.b16 %v573
        %v649 = vunpack.c.h.b16 %v573
        %v650 = vunpack.c.l.b16 %v574
        %v651 = vunpack.c.h.b16 %v574
        %v652 = vunpack.c.l.b16 %v575
        %v653 = vunpack.c.h.b16 %v575
        %v654 = vpack.c.b16 %v608, %v606
        %v655 = vpack.c.b16 %v609, %v607
        %v656 = vpack.c.b16 %v612, %v610
        %v657 = vpack.c.b16 %v613, %v611
        %v658 = vpack.c.b16 %v616, %v614
        %v659 = vpack.c.b16 %v617, %v615
        %v660 = vpack.c.b16 %v620, %v618
        %v661 = vpack.c.b16 %v621, %v619
        %v662 = vpack.c.b16 %v624, %v622
        %v663 = vpack.c.b16 %v625, %v623
        %v664 = vpack.c.b16 %v628, %v626
        %v665 = vpack.c.b16 %v629, %v627
        %v666 = vpack.c.b16 %v632, %v630
        %v667 = vpack.c.b16 %v633, %v631
        %v668 = vpack.c.b16 %v636, %v634
        %v669 = vpack.c.b16 %v637, %v635
        %v670 = vpack.c.b16 %v640, %v638
        %v671 = vpack.c.b16 %v641, %v639
        %v672 = vpack.c.b16 %v644, %v642
        %v673 = vpack.c.b16 %v645, %v643
        %v674 = vpack.c.b16 %v648, %v646
        %v675 = vpack.c.b16 %v649, %v647
        %v676 = vpack.c.b16 %v652, %v650
        %v677 = vpack.c.b16 %v653, %v651
        %v703 = vsel %vm331, %v548, 0
        %705 = vmatpush.bf16.msra.mxu0 %v668
        %706 = vmatpush.bf16.msra.mxu0 %v666
        %707 = vmatpush.bf16.msra.mxu0 %v664
        %708 = vmatpush.bf16.msra.mxu0 %v662
        %709 = vmatpush.bf16.msra.mxu0 %v660
        %710 = vmatpush.bf16.msra.mxu0 %v658
        %711 = vmatpush.bf16.msra.mxu0 %v656
        %712 = vmatpush.bf16.msra.mxu0 %v654
        %713 = vmatmul.bf16.gmra.mxu0 %v550
        %v714 = vpop.f32.mrf.mxu0
        %v715 = vadd.f32 %v578, %v714
        %v716 = vpop.f32.mrf.mxu0
        %v717 = vadd.f32 %v578, %v716
        %718 = vdwg.mxu0
        %719 = vmatpush.bf16.msra.mxu0 0
        %720 = vmatpush.bf16.msra.mxu0 0
        %721 = vmatpush.bf16.msra.mxu0 0
        %722 = vmatpush.bf16.msra.mxu0 0
        %723 = vmatpush.bf16.msra.mxu0 %v676
        %724 = vmatpush.bf16.msra.mxu0 %v674
        %725 = vmatpush.bf16.msra.mxu0 %v672
        %726 = vmatpush.bf16.msra.mxu0 %v670
        %727 = vmatmul.bf16.gmra.mxu0 %v703
        %v728 = vpop.f32.mrf.mxu0
        %v729 = vadd.f32 %v715, %v728
        %v730 = vpop.f32.mrf.mxu0
        %v731 = vadd.f32 %v717, %v730
        %732 = vdwg.mxu0
        %733 = vmatpush.bf16.msra.mxu0 %v669
        %734 = vmatpush.bf16.msra.mxu0 %v667
        %735 = vmatpush.bf16.msra.mxu0 %v665
        %736 = vmatpush.bf16.msra.mxu0 %v663
        %737 = vmatpush.bf16.msra.mxu0 %v661
        %738 = vmatpush.bf16.msra.mxu0 %v659
        %739 = vmatpush.bf16.msra.mxu0 %v657
        %740 = vmatpush.bf16.msra.mxu0 %v655
        %741 = vmatmul.bf16.gmra.mxu0 %v550
        %v742 = vpop.f32.mrf.mxu0
        %v743 = vadd.f32 %v579, %v742
        %v744 = vpop.f32.mrf.mxu0
        %v745 = vadd.f32 %v579, %v744
        %746 = vdwg.mxu0
        %747 = vmatpush.bf16.msra.mxu0 0
        %748 = vmatpush.bf16.msra.mxu0 0
        %749 = vmatpush.bf16.msra.mxu0 0
        %750 = vmatpush.bf16.msra.mxu0 0
        %751 = vmatpush.bf16.msra.mxu0 %v677
        %752 = vmatpush.bf16.msra.mxu0 %v675
        %753 = vmatpush.bf16.msra.mxu0 %v673
        %754 = vmatpush.bf16.msra.mxu0 %v671
        %755 = vmatmul.bf16.gmra.mxu0 %v703
        %v756 = vpop.f32.mrf.mxu0
        %v757 = vadd.f32 %v743, %v756
        %v758 = vpop.f32.mrf.mxu0
        %v759 = vadd.f32 %v745, %v758
        %760 = vdwg.mxu0
        %v761 = vmax.f32 %v729, 0.0
        %v762 = vmax.f32 %v757, 0.0
        %v763 = vmax.f32 %v731, 0.0
        %v764 = vmax.f32 %v759, 0.0
        %vm765 = vcmask 1040384
        %vm766 = vmand %vm765, %vm473
        %vm767 = vcmask 1044484
        %vm768 = vsmask.f32 4352
        %vm769 = vmand %vm767, %vm768
        %vm770 = vmor %vm769, %vm766
        %v771 = vld [vmem:[#allocation3] sm:$0x11]
        %v772 = vsel %vm770, 0, %v771
        %773 = vst [vmem:[#allocation3] sm:$0x11] %v772
        %vm774 = vmand %vm765, %vm478
        %vm775 = vsmask.f32 7954
        %vm776 = vmand %vm767, %vm775
        %vm777 = vmor %vm776, %vm774
        %v778 = vld [vmem:[#allocation3 + $0x10] sm:$0x11]
        %v779 = vsel %vm777, 0, %v778
        %780 = vst [vmem:[#allocation3 + $0x10] sm:$0x11] %v779
        %v781 = vpack.c.bf16 %v762, %v761
        %v782 = vpack.c.bf16 %v764, %v763
        %v784 = vshrl.u32 %v781, 16
        %v786 = vrot.slane %v784, 7
        %v787 = vshll.u32 %v781, 16
        %v789 = vor.u32 %v786, %v787
        %v790 = vrot.slane %v786, 4
        %v792 = vshrl.u32 %v782, 16
        %v794 = vrot.slane %v792, 7
        %v795 = vshll.u32 %v782, 16
        %v797 = vor.u32 %v794, %v795
        %v798 = vsel %vm486, %v790, %v797
        %v799 = vrot.slane %v794, 4
        %vm803 = vcmask 1043456
        %vm804 = vmand %vm803, %vm478
        %vm805 = vcmask 1047556
        %vm806 = vmand %vm805, %vm775
        %vm807 = vmor %vm806, %vm804
        %v808 = vld [vmem:[#allocation3] sm:$0xff]
        %v809 = vsel %vm807, %v789, %v808
        %810 = vst [vmem:[#allocation3] sm:$0xff] %v809
        %811 = vst [vmem:[#allocation3 + $0x8] sm:$0xff] %v798
        %v812 = vld [vmem:[#allocation3 + $0x10] sm:$0x11]
        %v813 = vsel %vm770, %v799, %v812
        %814 = vst [vmem:[#allocation3 + $0x10] sm:$0x11] %v813
        %v815 = vld [vmem:[#allocation3] sm:$0xff]
        %v816 = vld [vmem:[#allocation3 + $0x8] sm:$0xff]
        %v817 = vld [vmem:[#allocation3 + $0x10] sm:$0x11]
        %v820 = vunpack.c.l.b16 %v815
        %v821 = vunpack.c.h.b16 %v815
        %v822 = vunpack.c.l.b16 %v816
        %v823 = vunpack.c.h.b16 %v816
        %v824 = vpack.c.b16 %v822, %v820
        %v825 = vpack.c.b16 %v823, %v821
        %v829 = vunpack.c.l.b16 %v817
        %v830 = vunpack.c.h.b16 %v817
        %v831 = vpack.c.b16 %v829, %v829
        %v832 = vpack.c.b16 %v830, %v830
        %v834 = vshrl.u32 %v824, 16
        %v836 = vshll.u32 %v824, 16
        %v838 = vrot.slane %v836, 1
        %v839 = vor.u32 %v834, %v838
        %v841 = vshll.u32 %v831, 16
        %v843 = vrot.slane %v841, 1
        %v844 = vsel %vm309, %v839, %v843
        %v846 = vshrl.u32 %v825, 16
        %v848 = vshll.u32 %v825, 16
        %v850 = vrot.slane %v848, 1
        %v851 = vor.u32 %v846, %v850
        %v853 = vshll.u32 %v832, 16
        %v855 = vrot.slane %v853, 1
        %v856 = vsel %vm309, %v851, %v855
        %v859 = vld [vmem:[#allocation4] sm:$0xff]
        %v860 = vld [vmem:[#allocation4 + $0x8] sm:$0xff]
        %v861 = vld [vmem:[#allocation4 + $0x10] sm:$0xff]
        %v862 = vld [vmem:[#allocation4 + $0x18] sm:$0xff]
        %v863 = vld [vmem:[#allocation4 + $0x20] sm:$0xff]
        %v864 = vld [vmem:[#allocation4 + $0x28] sm:$0xff]
        %v865 = vld [vmem:[#allocation4 + $0x30] sm:$0xff]
        %v866 = vld [vmem:[#allocation4 + $0x38] sm:$0xff]
        %v867 = vld [vmem:[#allocation4 + $0x40] sm:$0xff]
        %v868 = vld [vmem:[#allocation4 + $0x48] sm:$0xff]
        %v869 = vld [vmem:[#allocation4 + $0x50] sm:$0xff]
        %v870 = vld [vmem:[#allocation4 + $0x58] sm:$0xff]
        %v871 = vld [vmem:[#allocation4 + $0x60] sm:$0xff]
        %v872 = vld [vmem:[#allocation4 + $0x68] sm:$0xff]
        %v873 = vld [vmem:[#allocation4 + $0x70] sm:$0xff]
        %v874 = vld [vmem:[#allocation4 + $0x78] sm:$0xff]
        %v875 = vld [vmem:[#allocation4 + $0x80] sm:$0xff]
        %v876 = vld [vmem:[#allocation4 + $0x88] sm:$0xff]
        %v877 = vld [vmem:[#allocation4 + $0x90] sm:$0xff]
        %v878 = vld [vmem:[#allocation4 + $0x98] sm:$0xff]
        %v879 = vld [vmem:[#allocation4 + $0xa0] sm:$0xff]
        %v880 = vld [vmem:[#allocation4 + $0xa8] sm:$0xff]
        %v881 = vld [vmem:[#allocation4 + $0xb0] sm:$0xff]
        %v882 = vld [vmem:[#allocation4 + $0xb8] sm:$0xff]
        %v883 = vld [vmem:[#allocation4 + $0xc0] sm:$0xff]
        %v884 = vld [vmem:[#allocation4 + $0xc8] sm:$0xff]
        %v885 = vld [vmem:[#allocation4 + $0xd0] sm:$0xff]
        %v886 = vld [vmem:[#allocation4 + $0xd8] sm:$0xff]
        %v887 = vld [vmem:[#allocation4 + $0xe0] sm:$0xff]
        %v888 = vld [vmem:[#allocation4 + $0xe8] sm:$0xff]
        %v889 = vld [vmem:[#allocation4 + $0xf0] sm:$0xff]
        %v890 = vld [vmem:[#allocation4 + $0xf8] sm:$0xff]
        %v891 = vld [vmem:[#allocation4 + $0x100] sm:$0xff]
        %v892 = vld [vmem:[#allocation4 + $0x108] sm:$0xff]
        %v893 = vld [vmem:[#allocation4 + $0x110] sm:$0xff]
        %v894 = vld [vmem:[#allocation4 + $0x118] sm:$0xff]
        %v895 = vld [vmem:[#allocation4 + $0x120] sm:$0xff]
        %v896 = vld [vmem:[#allocation4 + $0x128] sm:$0xff]
        %v897 = vld [vmem:[#allocation4 + $0x130] sm:$0xff]
        %v898 = vld [vmem:[#allocation4 + $0x138] sm:$0xff]
        %v899 = vld [vmem:[#allocation4 + $0x140] sm:$0xff]
        %v900 = vld [vmem:[#allocation4 + $0x148] sm:$0xff]
        %v901 = vld [vmem:[#allocation4 + $0x150] sm:$0xff]
        %v902 = vld [vmem:[#allocation4 + $0x158] sm:$0xff]
        %v903 = vld [vmem:[#allocation4 + $0x160] sm:$0xff]
        %v904 = vld [vmem:[#allocation4 + $0x168] sm:$0xff]
        %v905 = vld [vmem:[#allocation4 + $0x170] sm:$0xff]
        %v906 = vld [vmem:[#allocation4 + $0x178] sm:$0xff]
        %v907 = vld [vmem:[#allocation4 + $0x180] sm:$0xff]
        %v908 = vld [vmem:[#allocation4 + $0x188] sm:$0xff]
        %v909 = vld [vmem:[#allocation4 + $0x190] sm:$0xff]
        %v910 = vld [vmem:[#allocation4 + $0x198] sm:$0xff]
        %v911 = vld [vmem:[#allocation4 + $0x1a0] sm:$0xff]
        %v912 = vld [vmem:[#allocation4 + $0x1a8] sm:$0xff]
        %v913 = vld [vmem:[#allocation4 + $0x1b0] sm:$0xff]
        %v914 = vld [vmem:[#allocation4 + $0x1b8] sm:$0xff]
        %v915 = vld [vmem:[#allocation4 + $0x1c0] sm:$0xff]
        %v916 = vld [vmem:[#allocation4 + $0x1c8] sm:$0xff]
        %v917 = vld [vmem:[#allocation4 + $0x1d0] sm:$0xff]
        %v918 = vld [vmem:[#allocation4 + $0x1d8] sm:$0xff]
        %v919 = vld [vmem:[#allocation4 + $0x1e0] sm:$0xff]
        %v920 = vld [vmem:[#allocation4 + $0x1e8] sm:$0xff]
        %v921 = vld [vmem:[#allocation4 + $0x1f0] sm:$0xff]
        %v922 = vld [vmem:[#allocation4 + $0x1f8] sm:$0xff]
        %v923 = vld [vmem:[%s6] sm:$0x3]
        %v925 = vperm.slane %v923, 0
        %v926 = vperm.slane %v923, 1
        %v993 = vunpack.c.l.b16 %v859
        %v994 = vunpack.c.h.b16 %v859
        %v995 = vunpack.c.l.b16 %v860
        %v996 = vunpack.c.h.b16 %v860
        %v997 = vunpack.c.l.b16 %v861
        %v998 = vunpack.c.h.b16 %v861
        %v999 = vunpack.c.l.b16 %v862
        %v1000 = vunpack.c.h.b16 %v862
        %v1001 = vunpack.c.l.b16 %v863
        %v1002 = vunpack.c.h.b16 %v863
        %v1003 = vunpack.c.l.b16 %v864
        %v1004 = vunpack.c.h.b16 %v864
        %v1005 = vunpack.c.l.b16 %v865
        %v1006 = vunpack.c.h.b16 %v865
        %v1007 = vunpack.c.l.b16 %v866
        %v1008 = vunpack.c.h.b16 %v866
        %v1009 = vunpack.c.l.b16 %v867
        %v1010 = vunpack.c.h.b16 %v867
        %v1011 = vunpack.c.l.b16 %v868
        %v1012 = vunpack.c.h.b16 %v868
        %v1013 = vunpack.c.l.b16 %v869
        %v1014 = vunpack.c.h.b16 %v869
        %v1015 = vunpack.c.l.b16 %v870
        %v1016 = vunpack.c.h.b16 %v870
        %v1017 = vunpack.c.l.b16 %v871
        %v1018 = vunpack.c.h.b16 %v871
        %v1019 = vunpack.c.l.b16 %v872
        %v1020 = vunpack.c.h.b16 %v872
        %v1021 = vunpack.c.l.b16 %v873
        %v1022 = vunpack.c.h.b16 %v873
        %v1023 = vunpack.c.l.b16 %v874
        %v1024 = vunpack.c.h.b16 %v874
        %v1025 = vunpack.c.l.b16 %v875
        %v1026 = vunpack.c.h.b16 %v875
        %v1027 = vunpack.c.l.b16 %v876
        %v1028 = vunpack.c.h.b16 %v876
        %v1029 = vunpack.c.l.b16 %v877
        %v1030 = vunpack.c.h.b16 %v877
        %v1031 = vunpack.c.l.b16 %v878
        %v1032 = vunpack.c.h.b16 %v878
        %v1033 = vunpack.c.l.b16 %v879
        %v1034 = vunpack.c.h.b16 %v879
        %v1035 = vunpack.c.l.b16 %v880
        %v1036 = vunpack.c.h.b16 %v880
        %v1037 = vunpack.c.l.b16 %v881
        %v1038 = vunpack.c.h.b16 %v881
        %v1039 = vunpack.c.l.b16 %v882
        %v1040 = vunpack.c.h.b16 %v882
        %v1041 = vunpack.c.l.b16 %v883
        %v1042 = vunpack.c.h.b16 %v883
        %v1043 = vunpack.c.l.b16 %v884
        %v1044 = vunpack.c.h.b16 %v884
        %v1045 = vunpack.c.l.b16 %v885
        %v1046 = vunpack.c.h.b16 %v885
        %v1047 = vunpack.c.l.b16 %v886
        %v1048 = vunpack.c.h.b16 %v886
        %v1049 = vunpack.c.l.b16 %v887
        %v1050 = vunpack.c.h.b16 %v887
        %v1051 = vunpack.c.l.b16 %v888
        %v1052 = vunpack.c.h.b16 %v888
        %v1053 = vunpack.c.l.b16 %v889
        %v1054 = vunpack.c.h.b16 %v889
        %v1055 = vunpack.c.l.b16 %v890
        %v1056 = vunpack.c.h.b16 %v890
        %v1057 = vunpack.c.l.b16 %v891
        %v1058 = vunpack.c.h.b16 %v891
        %v1059 = vunpack.c.l.b16 %v892
        %v1060 = vunpack.c.h.b16 %v892
        %v1061 = vunpack.c.l.b16 %v893
        %v1062 = vunpack.c.h.b16 %v893
        %v1063 = vunpack.c.l.b16 %v894
        %v1064 = vunpack.c.h.b16 %v894
        %v1065 = vunpack.c.l.b16 %v895
        %v1066 = vunpack.c.h.b16 %v895
        %v1067 = vunpack.c.l.b16 %v896
        %v1068 = vunpack.c.h.b16 %v896
        %v1069 = vunpack.c.l.b16 %v897
        %v1070 = vunpack.c.h.b16 %v897
        %v1071 = vunpack.c.l.b16 %v898
        %v1072 = vunpack.c.h.b16 %v898
        %v1073 = vunpack.c.l.b16 %v899
        %v1074 = vunpack.c.h.b16 %v899
        %v1075 = vunpack.c.l.b16 %v900
        %v1076 = vunpack.c.h.b16 %v900
        %v1077 = vunpack.c.l.b16 %v901
        %v1078 = vunpack.c.h.b16 %v901
        %v1079 = vunpack.c.l.b16 %v902
        %v1080 = vunpack.c.h.b16 %v902
        %v1081 = vunpack.c.l.b16 %v903
        %v1082 = vunpack.c.h.b16 %v903
        %v1083 = vunpack.c.l.b16 %v904
        %v1084 = vunpack.c.h.b16 %v904
        %v1085 = vunpack.c.l.b16 %v905
        %v1086 = vunpack.c.h.b16 %v905
        %v1087 = vunpack.c.l.b16 %v906
        %v1088 = vunpack.c.h.b16 %v906
        %v1089 = vunpack.c.l.b16 %v907
        %v1090 = vunpack.c.h.b16 %v907
        %v1091 = vunpack.c.l.b16 %v908
        %v1092 = vunpack.c.h.b16 %v908
        %v1093 = vunpack.c.l.b16 %v909
        %v1094 = vunpack.c.h.b16 %v909
        %v1095 = vunpack.c.l.b16 %v910
        %v1096 = vunpack.c.h.b16 %v910
        %v1097 = vunpack.c.l.b16 %v911
        %v1098 = vunpack.c.h.b16 %v911
        %v1099 = vunpack.c.l.b16 %v912
        %v1100 = vunpack.c.h.b16 %v912
        %v1101 = vunpack.c.l.b16 %v913
        %v1102 = vunpack.c.h.b16 %v913
        %v1103 = vunpack.c.l.b16 %v914
        %v1104 = vunpack.c.h.b16 %v914
        %v1105 = vunpack.c.l.b16 %v915
        %v1106 = vunpack.c.h.b16 %v915
        %v1107 = vunpack.c.l.b16 %v916
        %v1108 = vunpack.c.h.b16 %v916
        %v1109 = vunpack.c.l.b16 %v917
        %v1110 = vunpack.c.h.b16 %v917
        %v1111 = vunpack.c.l.b16 %v918
        %v1112 = vunpack.c.h.b16 %v918
        %v1113 = vunpack.c.l.b16 %v919
        %v1114 = vunpack.c.h.b16 %v919
        %v1115 = vunpack.c.l.b16 %v920
        %v1116 = vunpack.c.h.b16 %v920
        %v1117 = vunpack.c.l.b16 %v921
        %v1118 = vunpack.c.h.b16 %v921
        %v1119 = vunpack.c.l.b16 %v922
        %v1120 = vunpack.c.h.b16 %v922
        %v1121 = vpack.c.b16 %v995, %v993
        %v1122 = vpack.c.b16 %v996, %v994
        %v1123 = vpack.c.b16 %v999, %v997
        %v1124 = vpack.c.b16 %v1000, %v998
        %v1125 = vpack.c.b16 %v1003, %v1001
        %v1126 = vpack.c.b16 %v1004, %v1002
        %v1127 = vpack.c.b16 %v1007, %v1005
        %v1128 = vpack.c.b16 %v1008, %v1006
        %v1129 = vpack.c.b16 %v1011, %v1009
        %v1130 = vpack.c.b16 %v1012, %v1010
        %v1131 = vpack.c.b16 %v1015, %v1013
        %v1132 = vpack.c.b16 %v1016, %v1014
        %v1133 = vpack.c.b16 %v1019, %v1017
        %v1134 = vpack.c.b16 %v1020, %v1018
        %v1135 = vpack.c.b16 %v1023, %v1021
        %v1136 = vpack.c.b16 %v1024, %v1022
        %v1137 = vpack.c.b16 %v1027, %v1025
        %v1138 = vpack.c.b16 %v1028, %v1026
        %v1139 = vpack.c.b16 %v1031, %v1029
        %v1140 = vpack.c.b16 %v1032, %v1030
        %v1141 = vpack.c.b16 %v1035, %v1033
        %v1142 = vpack.c.b16 %v1036, %v1034
        %v1143 = vpack.c.b16 %v1039, %v1037
        %v1144 = vpack.c.b16 %v1040, %v1038
        %v1145 = vpack.c.b16 %v1043, %v1041
        %v1146 = vpack.c.b16 %v1044, %v1042
        %v1147 = vpack.c.b16 %v1047, %v1045
        %v1148 = vpack.c.b16 %v1048, %v1046
        %v1149 = vpack.c.b16 %v1051, %v1049
        %v1150 = vpack.c.b16 %v1052, %v1050
        %v1151 = vpack.c.b16 %v1055, %v1053
        %v1152 = vpack.c.b16 %v1056, %v1054
        %v1153 = vpack.c.b16 %v1059, %v1057
        %v1154 = vpack.c.b16 %v1060, %v1058
        %v1155 = vpack.c.b16 %v1063, %v1061
        %v1156 = vpack.c.b16 %v1064, %v1062
        %v1157 = vpack.c.b16 %v1067, %v1065
        %v1158 = vpack.c.b16 %v1068, %v1066
        %v1159 = vpack.c.b16 %v1071, %v1069
        %v1160 = vpack.c.b16 %v1072, %v1070
        %v1161 = vpack.c.b16 %v1075, %v1073
        %v1162 = vpack.c.b16 %v1076, %v1074
        %v1163 = vpack.c.b16 %v1079, %v1077
        %v1164 = vpack.c.b16 %v1080, %v1078
        %v1165 = vpack.c.b16 %v1083, %v1081
        %v1166 = vpack.c.b16 %v1084, %v1082
        %v1167 = vpack.c.b16 %v1087, %v1085
        %v1168 = vpack.c.b16 %v1088, %v1086
        %v1169 = vpack.c.b16 %v1091, %v1089
        %v1170 = vpack.c.b16 %v1092, %v1090
        %v1171 = vpack.c.b16 %v1095, %v1093
        %v1172 = vpack.c.b16 %v1096, %v1094
        %v1173 = vpack.c.b16 %v1099, %v1097
        %v1174 = vpack.c.b16 %v1100, %v1098
        %v1175 = vpack.c.b16 %v1103, %v1101
        %v1176 = vpack.c.b16 %v1104, %v1102
        %v1177 = vpack.c.b16 %v1107, %v1105
        %v1178 = vpack.c.b16 %v1108, %v1106
        %v1179 = vpack.c.b16 %v1111, %v1109
        %v1180 = vpack.c.b16 %v1112, %v1110
        %v1181 = vpack.c.b16 %v1115, %v1113
        %v1182 = vpack.c.b16 %v1116, %v1114
        %v1183 = vpack.c.b16 %v1119, %v1117
        %v1184 = vpack.c.b16 %v1120, %v1118
        %1249 = vmatpush.bf16.msra.mxu0 %v1135
        %1250 = vmatpush.bf16.msra.mxu0 %v1133
        %1251 = vmatpush.bf16.msra.mxu0 %v1131
        %1252 = vmatpush.bf16.msra.mxu0 %v1129
        %1253 = vmatpush.bf16.msra.mxu0 %v1127
        %1254 = vmatpush.bf16.msra.mxu0 %v1125
        %1255 = vmatpush.bf16.msra.mxu0 %v1123
        %1256 = vmatpush.bf16.msra.mxu0 %v1121
        %1257 = vmatmul.bf16.gmra.mxu0 %v824
        %v1258 = vpop.f32.mrf.mxu0
        %v1259 = vadd.f32 %v925, %v1258
        %v1260 = vpop.f32.mrf.mxu0
        %v1261 = vadd.f32 %v925, %v1260
        %1262 = vdwg.mxu0
        %1263 = vmatpush.bf16.msra.mxu0 %v1151
        %1264 = vmatpush.bf16.msra.mxu0 %v1149
        %1265 = vmatpush.bf16.msra.mxu0 %v1147
        %1266 = vmatpush.bf16.msra.mxu0 %v1145
        %1267 = vmatpush.bf16.msra.mxu0 %v1143
        %1268 = vmatpush.bf16.msra.mxu0 %v1141
        %1269 = vmatpush.bf16.msra.mxu0 %v1139
        %1270 = vmatpush.bf16.msra.mxu0 %v1137
        %1271 = vmatmul.bf16.gmra.mxu0 %v825
        %v1272 = vpop.f32.mrf.mxu0
        %v1273 = vadd.f32 %v1259, %v1272
        %v1274 = vpop.f32.mrf.mxu0
        %v1275 = vadd.f32 %v1261, %v1274
        %1276 = vdwg.mxu0
        %1277 = vmatpush.bf16.msra.mxu0 %v1167
        %1278 = vmatpush.bf16.msra.mxu0 %v1165
        %1279 = vmatpush.bf16.msra.mxu0 %v1163
        %1280 = vmatpush.bf16.msra.mxu0 %v1161
        %1281 = vmatpush.bf16.msra.mxu0 %v1159
        %1282 = vmatpush.bf16.msra.mxu0 %v1157
        %1283 = vmatpush.bf16.msra.mxu0 %v1155
        %1284 = vmatpush.bf16.msra.mxu0 %v1153
        %1285 = vmatmul.bf16.gmra.mxu0 %v844
        %v1286 = vpop.f32.mrf.mxu0
        %v1287 = vadd.f32 %v1273, %v1286
        %v1288 = vpop.f32.mrf.mxu0
        %v1289 = vadd.f32 %v1275, %v1288
        %1290 = vdwg.mxu0
        %1291 = vmatpush.bf16.msra.mxu0 %v1183
        %1292 = vmatpush.bf16.msra.mxu0 %v1181
        %1293 = vmatpush.bf16.msra.mxu0 %v1179
        %1294 = vmatpush.bf16.msra.mxu0 %v1177
        %1295 = vmatpush.bf16.msra.mxu0 %v1175
        %1296 = vmatpush.bf16.msra.mxu0 %v1173
        %1297 = vmatpush.bf16.msra.mxu0 %v1171
        %1298 = vmatpush.bf16.msra.mxu0 %v1169
        %1299 = vmatmul.bf16.gmra.mxu0 %v856
        %v1300 = vpop.f32.mrf.mxu0
        %v1301 = vadd.f32 %v1287, %v1300
        %v1302 = vpop.f32.mrf.mxu0
        %v1303 = vadd.f32 %v1289, %v1302
        %1304 = vdwg.mxu0
        %1305 = vmatpush.bf16.msra.mxu0 %v1136
        %1306 = vmatpush.bf16.msra.mxu0 %v1134
        %1307 = vmatpush.bf16.msra.mxu0 %v1132
        %1308 = vmatpush.bf16.msra.mxu0 %v1130
        %1309 = vmatpush.bf16.msra.mxu0 %v1128
        %1310 = vmatpush.bf16.msra.mxu0 %v1126
        %1311 = vmatpush.bf16.msra.mxu0 %v1124
        %1312 = vmatpush.bf16.msra.mxu0 %v1122
        %1313 = vmatmul.bf16.gmra.mxu0 %v824
        %v1314 = vpop.f32.mrf.mxu0
        %v1315 = vadd.f32 %v926, %v1314
        %v1316 = vpop.f32.mrf.mxu0
        %v1317 = vadd.f32 %v926, %v1316
        %1318 = vdwg.mxu0
        %1319 = vmatpush.bf16.msra.mxu0 %v1152
        %1320 = vmatpush.bf16.msra.mxu0 %v1150
        %1321 = vmatpush.bf16.msra.mxu0 %v1148
        %1322 = vmatpush.bf16.msra.mxu0 %v1146
        %1323 = vmatpush.bf16.msra.mxu0 %v1144
        %1324 = vmatpush.bf16.msra.mxu0 %v1142
        %1325 = vmatpush.bf16.msra.mxu0 %v1140
        %1326 = vmatpush.bf16.msra.mxu0 %v1138
        %1327 = vmatmul.bf16.gmra.mxu0 %v825
        %v1328 = vpop.f32.mrf.mxu0
        %v1329 = vadd.f32 %v1315, %v1328
        %v1330 = vpop.f32.mrf.mxu0
        %v1331 = vadd.f32 %v1317, %v1330
        %1332 = vdwg.mxu0
        %1333 = vmatpush.bf16.msra.mxu0 %v1168
        %1334 = vmatpush.bf16.msra.mxu0 %v1166
        %1335 = vmatpush.bf16.msra.mxu0 %v1164
        %1336 = vmatpush.bf16.msra.mxu0 %v1162
        %1337 = vmatpush.bf16.msra.mxu0 %v1160
        %1338 = vmatpush.bf16.msra.mxu0 %v1158
        %1339 = vmatpush.bf16.msra.mxu0 %v1156
        %1340 = vmatpush.bf16.msra.mxu0 %v1154
        %1341 = vmatmul.bf16.gmra.mxu0 %v844
        %v1342 = vpop.f32.mrf.mxu0
        %v1343 = vadd.f32 %v1329, %v1342
        %v1344 = vpop.f32.mrf.mxu0
        %v1345 = vadd.f32 %v1331, %v1344
        %1346 = vdwg.mxu0
        %1347 = vmatpush.bf16.msra.mxu0 %v1184
        %1348 = vmatpush.bf16.msra.mxu0 %v1182
        %1349 = vmatpush.bf16.msra.mxu0 %v1180
        %1350 = vmatpush.bf16.msra.mxu0 %v1178
        %1351 = vmatpush.bf16.msra.mxu0 %v1176
        %1352 = vmatpush.bf16.msra.mxu0 %v1174
        %1353 = vmatpush.bf16.msra.mxu0 %v1172
        %1354 = vmatpush.bf16.msra.mxu0 %v1170
        %1355 = vmatmul.bf16.gmra.mxu0 %v856
        %v1356 = vpop.f32.mrf.mxu0
        %v1357 = vadd.f32 %v1343, %v1356
        %v1358 = vpop.f32.mrf.mxu0
        %v1359 = vadd.f32 %v1345, %v1358
        %1360 = vdwg.mxu0
        %vm1361 = vcmp.ge.f32.partialorder %v1301, 0.0
        %vm1362 = vcmp.ge.f32.partialorder %v1357, 0.0
        %vm1363 = vcmp.ge.f32.partialorder %v1303, 0.0
        %vm1364 = vcmp.ge.f32.partialorder %v1359, 0.0
        %v1365 = vmul.f32 %v1301, 0.2
        %v1366 = vmul.f32 %v1357, 0.2
        %v1367 = vmul.f32 %v1303, 0.2
        %v1368 = vmul.f32 %v1359, 0.2
        %v1369 = vsel %vm1361, %v1301, %v1365
        %v1370 = vsel %vm1362, %v1357, %v1366
        %v1371 = vsel %vm1363, %v1303, %v1367
        %v1372 = vsel %vm1364, %v1359, %v1368
        %1373 = vst [vmem:[%s295] sm:$0xff] %v1369
        %1374 = vst [vmem:[%s295 + $0x8] sm:$0xff] %v1370
        %1375 = vst [vmem:[%s295 + $0x10] sm:$0xff] %v1371
        %1376 = vst [vmem:[%s295 + $0x18] sm:$0xff] %v1372
        %v1377 = vld [vmem:[#allocation3] sm:$0xff]
        %v1378 = vld [vmem:[#allocation3 + $0x8] sm:$0xff]
        %v1379 = vld [vmem:[#allocation3 + $0x10] sm:$0x11]
        %v1380 = vld [vmem:[#allocation3] sm:$0xee]
        %v1384 = vunpack.c.l.b16 %v1377
        %v1385 = vunpack.c.h.b16 %v1377
        %v1386 = vunpack.c.l.b16 %v1378
        %v1387 = vunpack.c.h.b16 %v1378
        %v1388 = vunpack.c.l.b16 %v1379
        %v1389 = vunpack.c.h.b16 %v1379
        %v1390 = vpack.c.b16 %v1386, %v1384
        %v1391 = vpack.c.b16 %v1387, %v1385
        %v1392 = vpack.c.b16 %v1388, %v1388
        %v1393 = vpack.c.b16 %v1389, %v1389
        %v1395 = vunpack.c.l.b16 %v1380
        %v1396 = vunpack.c.h.b16 %v1380
        %v1397 = vpack.c.b16 %v1386, %v1395
        %v1398 = vpack.c.b16 %v1387, %v1396
        %v1400 = vshrl.u32 %v1397, 16
        %v1402 = vshll.u32 %v1397, 16
        %v1404 = vrot.slane %v1402, 1
        %v1405 = vor.u32 %v1400, %v1404
        %v1407 = vshll.u32 %v1392, 16
        %v1409 = vrot.slane %v1407, 1
        %v1410 = vsel %vm309, %v1405, %v1409
        %v1412 = vshrl.u32 %v1398, 16
        %v1414 = vshll.u32 %v1398, 16
        %v1416 = vrot.slane %v1414, 1
        %v1417 = vor.u32 %v1412, %v1416
        %v1419 = vshll.u32 %v1393, 16
        %v1421 = vrot.slane %v1419, 1
        %v1422 = vsel %vm309, %v1417, %v1421
        %v1423 = vshrl.u32 %v1392, 16
        %v1425 = vshrl.u32 %v1393, 16
        %s1427 = scalar_lea.vmem [#allocation4], 512
        %v1428 = vld [vmem:[%s1427] sm:$0xff]
        %v1429 = vld [vmem:[%s1427 + $0x8] sm:$0xff]
        %v1430 = vld [vmem:[%s1427 + $0x10] sm:$0xff]
        %v1431 = vld [vmem:[%s1427 + $0x18] sm:$0xff]
        %v1432 = vld [vmem:[%s1427 + $0x20] sm:$0xff]
        %v1433 = vld [vmem:[%s1427 + $0x28] sm:$0xff]
        %v1434 = vld [vmem:[%s1427 + $0x30] sm:$0xff]
        %v1435 = vld [vmem:[%s1427 + $0x38] sm:$0xff]
        %v1436 = vld [vmem:[%s1427 + $0x40] sm:$0xff]
        %v1437 = vld [vmem:[%s1427 + $0x48] sm:$0xff]
        %v1438 = vld [vmem:[%s1427 + $0x50] sm:$0xff]
        %v1439 = vld [vmem:[%s1427 + $0x58] sm:$0xff]
        %v1440 = vld [vmem:[%s1427 + $0x60] sm:$0xff]
        %v1441 = vld [vmem:[%s1427 + $0x68] sm:$0xff]
        %v1442 = vld [vmem:[%s1427 + $0x70] sm:$0xff]
        %v1443 = vld [vmem:[%s1427 + $0x78] sm:$0xff]
        %v1444 = vld [vmem:[%s1427 + $0x80] sm:$0xff]
        %v1445 = vld [vmem:[%s1427 + $0x88] sm:$0xff]
        %v1446 = vld [vmem:[%s1427 + $0x90] sm:$0xff]
        %v1447 = vld [vmem:[%s1427 + $0x98] sm:$0xff]
        %v1448 = vld [vmem:[%s1427 + $0xa0] sm:$0xff]
        %v1449 = vld [vmem:[%s1427 + $0xa8] sm:$0xff]
        %v1450 = vld [vmem:[%s1427 + $0xb0] sm:$0xff]
        %v1451 = vld [vmem:[%s1427 + $0xb8] sm:$0xff]
        %v1452 = vld [vmem:[%s1427 + $0xc0] sm:$0xff]
        %v1453 = vld [vmem:[%s1427 + $0xc8] sm:$0xff]
        %v1454 = vld [vmem:[%s1427 + $0xd0] sm:$0xff]
        %v1455 = vld [vmem:[%s1427 + $0xd8] sm:$0xff]
        %v1456 = vld [vmem:[%s1427 + $0xe0] sm:$0xff]
        %v1457 = vld [vmem:[%s1427 + $0xe8] sm:$0xff]
        %v1458 = vld [vmem:[%s1427 + $0xf0] sm:$0xff]
        %v1459 = vld [vmem:[%s1427 + $0xf8] sm:$0xff]
        %v1460 = vld [vmem:[%s1427 + $0x100] sm:$0xff]
        %v1461 = vld [vmem:[%s1427 + $0x108] sm:$0xff]
        %v1462 = vld [vmem:[%s1427 + $0x110] sm:$0xff]
        %v1463 = vld [vmem:[%s1427 + $0x118] sm:$0xff]
        %v1464 = vld [vmem:[%s1427 + $0x120] sm:$0xff]
        %v1465 = vld [vmem:[%s1427 + $0x128] sm:$0xff]
        %v1466 = vld [vmem:[%s1427 + $0x130] sm:$0xff]
        %v1467 = vld [vmem:[%s1427 + $0x138] sm:$0xff]
        %v1468 = vld [vmem:[%s1427 + $0x140] sm:$0xff]
        %v1469 = vld [vmem:[%s1427 + $0x148] sm:$0xff]
        %v1470 = vld [vmem:[%s1427 + $0x150] sm:$0xff]
        %v1471 = vld [vmem:[%s1427 + $0x158] sm:$0xff]
        %v1472 = vld [vmem:[%s1427 + $0x160] sm:$0xff]
        %v1473 = vld [vmem:[%s1427 + $0x168] sm:$0xff]
        %v1474 = vld [vmem:[%s1427 + $0x170] sm:$0xff]
        %v1475 = vld [vmem:[%s1427 + $0x178] sm:$0xff]
        %v1476 = vld [vmem:[%s1427 + $0x180] sm:$0xff]
        %v1477 = vld [vmem:[%s1427 + $0x188] sm:$0xff]
        %v1478 = vld [vmem:[%s1427 + $0x190] sm:$0xff]
        %v1479 = vld [vmem:[%s1427 + $0x198] sm:$0xff]
        %v1480 = vld [vmem:[%s1427 + $0x1a0] sm:$0xff]
        %v1481 = vld [vmem:[%s1427 + $0x1a8] sm:$0xff]
        %v1482 = vld [vmem:[%s1427 + $0x1b0] sm:$0xff]
        %v1483 = vld [vmem:[%s1427 + $0x1b8] sm:$0xff]
        %v1484 = vld [vmem:[%s1427 + $0x1c0] sm:$0xff]
        %v1485 = vld [vmem:[%s1427 + $0x1c8] sm:$0xff]
        %v1486 = vld [vmem:[%s1427 + $0x1d0] sm:$0xff]
        %v1487 = vld [vmem:[%s1427 + $0x1d8] sm:$0xff]
        %v1488 = vld [vmem:[%s1427 + $0x1e0] sm:$0xff]
        %v1489 = vld [vmem:[%s1427 + $0x1e8] sm:$0xff]
        %v1490 = vld [vmem:[%s1427 + $0x1f0] sm:$0xff]
        %v1491 = vld [vmem:[%s1427 + $0x1f8] sm:$0xff]
        %v1492 = vld [vmem:[%s6] sm:$0x3]
        %v1494 = vperm.slane %v1492, 0
        %v1495 = vperm.slane %v1492, 1
        %v1499 = vshrl.u32 %v1390, 16
        %v1501 = vshll.u32 %v1390, 16
        %v1503 = vrot.slane %v1501, 1
        %v1504 = vor.u32 %v1499, %v1503
        %v1505 = vsel %vm309, %v1504, %v1409
        %v1507 = vshrl.u32 %v1391, 16
        %v1509 = vshll.u32 %v1391, 16
        %v1511 = vrot.slane %v1509, 1
        %v1512 = vor.u32 %v1507, %v1511
        %v1513 = vsel %vm309, %v1512, %v1421
        %v1515 = vshrl.u32 %v1410, 16
        %v1517 = vshll.u32 %v1410, 16
        %v1519 = vrot.slane %v1517, 1
        %v1520 = vor.u32 %v1515, %v1519
        %v1522 = vshll.u32 %v1423, 16
        %v1524 = vrot.slane %v1522, 1
        %v1525 = vsel %vm309, %v1520, %v1524
        %v1527 = vshrl.u32 %v1422, 16
        %v1529 = vshll.u32 %v1422, 16
        %v1531 = vrot.slane %v1529, 1
        %v1532 = vor.u32 %v1527, %v1531
        %v1534 = vshll.u32 %v1425, 16
        %v1536 = vrot.slane %v1534, 1
        %v1537 = vsel %vm309, %v1532, %v1536
        %v1606 = vunpack.c.l.b16 %v1428
        %v1607 = vunpack.c.h.b16 %v1428
        %v1608 = vunpack.c.l.b16 %v1429
        %v1609 = vunpack.c.h.b16 %v1429
        %v1610 = vunpack.c.l.b16 %v1430
        %v1611 = vunpack.c.h.b16 %v1430
        %v1612 = vunpack.c.l.b16 %v1431
        %v1613 = vunpack.c.h.b16 %v1431
        %v1614 = vunpack.c.l.b16 %v1432
        %v1615 = vunpack.c.h.b16 %v1432
        %v1616 = vunpack.c.l.b16 %v1433
        %v1617 = vunpack.c.h.b16 %v1433
        %v1618 = vunpack.c.l.b16 %v1434
        %v1619 = vunpack.c.h.b16 %v1434
        %v1620 = vunpack.c.l.b16 %v1435
        %v1621 = vunpack.c.h.b16 %v1435
        %v1622 = vunpack.c.l.b16 %v1436
        %v1623 = vunpack.c.h.b16 %v1436
        %v1624 = vunpack.c.l.b16 %v1437
        %v1625 = vunpack.c.h.b16 %v1437
        %v1626 = vunpack.c.l.b16 %v1438
        %v1627 = vunpack.c.h.b16 %v1438
        %v1628 = vunpack.c.l.b16 %v1439
        %v1629 = vunpack.c.h.b16 %v1439
        %v1630 = vunpack.c.l.b16 %v1440
        %v1631 = vunpack.c.h.b16 %v1440
        %v1632 = vunpack.c.l.b16 %v1441
        %v1633 = vunpack.c.h.b16 %v1441
        %v1634 = vunpack.c.l.b16 %v1442
        %v1635 = vunpack.c.h.b16 %v1442
        %v1636 = vunpack.c.l.b16 %v1443
        %v1637 = vunpack.c.h.b16 %v1443
        %v1638 = vunpack.c.l.b16 %v1444
        %v1639 = vunpack.c.h.b16 %v1444
        %v1640 = vunpack.c.l.b16 %v1445
        %v1641 = vunpack.c.h.b16 %v1445
        %v1642 = vunpack.c.l.b16 %v1446
        %v1643 = vunpack.c.h.b16 %v1446
        %v1644 = vunpack.c.l.b16 %v1447
        %v1645 = vunpack.c.h.b16 %v1447
        %v1646 = vunpack.c.l.b16 %v1448
        %v1647 = vunpack.c.h.b16 %v1448
        %v1648 = vunpack.c.l.b16 %v1449
        %v1649 = vunpack.c.h.b16 %v1449
        %v1650 = vunpack.c.l.b16 %v1450
        %v1651 = vunpack.c.h.b16 %v1450
        %v1652 = vunpack.c.l.b16 %v1451
        %v1653 = vunpack.c.h.b16 %v1451
        %v1654 = vunpack.c.l.b16 %v1452
        %v1655 = vunpack.c.h.b16 %v1452
        %v1656 = vunpack.c.l.b16 %v1453
        %v1657 = vunpack.c.h.b16 %v1453
        %v1658 = vunpack.c.l.b16 %v1454
        %v1659 = vunpack.c.h.b16 %v1454
        %v1660 = vunpack.c.l.b16 %v1455
        %v1661 = vunpack.c.h.b16 %v1455
        %v1662 = vunpack.c.l.b16 %v1456
        %v1663 = vunpack.c.h.b16 %v1456
        %v1664 = vunpack.c.l.b16 %v1457
        %v1665 = vunpack.c.h.b16 %v1457
        %v1666 = vunpack.c.l.b16 %v1458
        %v1667 = vunpack.c.h.b16 %v1458
        %v1668 = vunpack.c.l.b16 %v1459
        %v1669 = vunpack.c.h.b16 %v1459
        %v1670 = vunpack.c.l.b16 %v1460
        %v1671 = vunpack.c.h.b16 %v1460
        %v1672 = vunpack.c.l.b16 %v1461
        %v1673 = vunpack.c.h.b16 %v1461
        %v1674 = vunpack.c.l.b16 %v1462
        %v1675 = vunpack.c.h.b16 %v1462
        %v1676 = vunpack.c.l.b16 %v1463
        %v1677 = vunpack.c.h.b16 %v1463
        %v1678 = vunpack.c.l.b16 %v1464
        %v1679 = vunpack.c.h.b16 %v1464
        %v1680 = vunpack.c.l.b16 %v1465
        %v1681 = vunpack.c.h.b16 %v1465
        %v1682 = vunpack.c.l.b16 %v1466
        %v1683 = vunpack.c.h.b16 %v1466
        %v1684 = vunpack.c.l.b16 %v1467
        %v1685 = vunpack.c.h.b16 %v1467
        %v1686 = vunpack.c.l.b16 %v1468
        %v1687 = vunpack.c.h.b16 %v1468
        %v1688 = vunpack.c.l.b16 %v1469
        %v1689 = vunpack.c.h.b16 %v1469
        %v1690 = vunpack.c.l.b16 %v1470
        %v1691 = vunpack.c.h.b16 %v1470
        %v1692 = vunpack.c.l.b16 %v1471
        %v1693 = vunpack.c.h.b16 %v1471
        %v1694 = vunpack.c.l.b16 %v1472
        %v1695 = vunpack.c.h.b16 %v1472
        %v1696 = vunpack.c.l.b16 %v1473
        %v1697 = vunpack.c.h.b16 %v1473
        %v1698 = vunpack.c.l.b16 %v1474
        %v1699 = vunpack.c.h.b16 %v1474
        %v1700 = vunpack.c.l.b16 %v1475
        %v1701 = vunpack.c.h.b16 %v1475
        %v1702 = vunpack.c.l.b16 %v1476
        %v1703 = vunpack.c.h.b16 %v1476
        %v1704 = vunpack.c.l.b16 %v1477
        %v1705 = vunpack.c.h.b16 %v1477
        %v1706 = vunpack.c.l.b16 %v1478
        %v1707 = vunpack.c.h.b16 %v1478
        %v1708 = vunpack.c.l.b16 %v1479
        %v1709 = vunpack.c.h.b16 %v1479
        %v1710 = vunpack.c.l.b16 %v1480
        %v1711 = vunpack.c.h.b16 %v1480
        %v1712 = vunpack.c.l.b16 %v1481
        %v1713 = vunpack.c.h.b16 %v1481
        %v1714 = vunpack.c.l.b16 %v1482
        %v1715 = vunpack.c.h.b16 %v1482
        %v1716 = vunpack.c.l.b16 %v1483
        %v1717 = vunpack.c.h.b16 %v1483
        %v1718 = vunpack.c.l.b16 %v1484
        %v1719 = vunpack.c.h.b16 %v1484
        %v1720 = vunpack.c.l.b16 %v1485
        %v1721 = vunpack.c.h.b16 %v1485
        %v1722 = vunpack.c.l.b16 %v1486
        %v1723 = vunpack.c.h.b16 %v1486
        %v1724 = vunpack.c.l.b16 %v1487
        %v1725 = vunpack.c.h.b16 %v1487
        %v1726 = vunpack.c.l.b16 %v1488
        %v1727 = vunpack.c.h.b16 %v1488
        %v1728 = vunpack.c.l.b16 %v1489
        %v1729 = vunpack.c.h.b16 %v1489
        %v1730 = vunpack.c.l.b16 %v1490
        %v1731 = vunpack.c.h.b16 %v1490
        %v1732 = vunpack.c.l.b16 %v1491
        %v1733 = vunpack.c.h.b16 %v1491
        %v1734 = vpack.c.b16 %v1608, %v1606
        %v1735 = vpack.c.b16 %v1609, %v1607
        %v1736 = vpack.c.b16 %v1612, %v1610
        %v1737 = vpack.c.b16 %v1613, %v1611
        %v1738 = vpack.c.b16 %v1616, %v1614
        %v1739 = vpack.c.b16 %v1617, %v1615
        %v1740 = vpack.c.b16 %v1620, %v1618
        %v1741 = vpack.c.b16 %v1621, %v1619
        %v1742 = vpack.c.b16 %v1624, %v1622
        %v1743 = vpack.c.b16 %v1625, %v1623
        %v1744 = vpack.c.b16 %v1628, %v1626
        %v1745 = vpack.c.b16 %v1629, %v1627
        %v1746 = vpack.c.b16 %v1632, %v1630
        %v1747 = vpack.c.b16 %v1633, %v1631
        %v1748 = vpack.c.b16 %v1636, %v1634
        %v1749 = vpack.c.b16 %v1637, %v1635
        %v1750 = vpack.c.b16 %v1640, %v1638
        %v1751 = vpack.c.b16 %v1641, %v1639
        %v1752 = vpack.c.b16 %v1644, %v1642
        %v1753 = vpack.c.b16 %v1645, %v1643
        %v1754 = vpack.c.b16 %v1648, %v1646
        %v1755 = vpack.c.b16 %v1649, %v1647
        %v1756 = vpack.c.b16 %v1652, %v1650
        %v1757 = vpack.c.b16 %v1653, %v1651
        %v1758 = vpack.c.b16 %v1656, %v1654
        %v1759 = vpack.c.b16 %v1657, %v1655
        %v1760 = vpack.c.b16 %v1660, %v1658
        %v1761 = vpack.c.b16 %v1661, %v1659
        %v1762 = vpack.c.b16 %v1664, %v1662
        %v1763 = vpack.c.b16 %v1665, %v1663
        %v1764 = vpack.c.b16 %v1668, %v1666
        %v1765 = vpack.c.b16 %v1669, %v1667
        %v1766 = vpack.c.b16 %v1672, %v1670
        %v1767 = vpack.c.b16 %v1673, %v1671
        %v1768 = vpack.c.b16 %v1676, %v1674
        %v1769 = vpack.c.b16 %v1677, %v1675
        %v1770 = vpack.c.b16 %v1680, %v1678
        %v1771 = vpack.c.b16 %v1681, %v1679
        %v1772 = vpack.c.b16 %v1684, %v1682
        %v1773 = vpack.c.b16 %v1685, %v1683
        %v1774 = vpack.c.b16 %v1688, %v1686
        %v1775 = vpack.c.b16 %v1689, %v1687
        %v1776 = vpack.c.b16 %v1692, %v1690
        %v1777 = vpack.c.b16 %v1693, %v1691
        %v1778 = vpack.c.b16 %v1696, %v1694
        %v1779 = vpack.c.b16 %v1697, %v1695
        %v1780 = vpack.c.b16 %v1700, %v1698
        %v1781 = vpack.c.b16 %v1701, %v1699
        %v1782 = vpack.c.b16 %v1704, %v1702
        %v1783 = vpack.c.b16 %v1705, %v1703
        %v1784 = vpack.c.b16 %v1708, %v1706
        %v1785 = vpack.c.b16 %v1709, %v1707
        %v1786 = vpack.c.b16 %v1712, %v1710
        %v1787 = vpack.c.b16 %v1713, %v1711
        %v1788 = vpack.c.b16 %v1716, %v1714
        %v1789 = vpack.c.b16 %v1717, %v1715
        %v1790 = vpack.c.b16 %v1720, %v1718
        %v1791 = vpack.c.b16 %v1721, %v1719
        %v1792 = vpack.c.b16 %v1724, %v1722
        %v1793 = vpack.c.b16 %v1725, %v1723
        %v1794 = vpack.c.b16 %v1728, %v1726
        %v1795 = vpack.c.b16 %v1729, %v1727
        %v1796 = vpack.c.b16 %v1732, %v1730
        %v1797 = vpack.c.b16 %v1733, %v1731
        %1862 = vmatpush.bf16.msra.mxu0 %v1748
        %1863 = vmatpush.bf16.msra.mxu0 %v1746
        %1864 = vmatpush.bf16.msra.mxu0 %v1744
        %1865 = vmatpush.bf16.msra.mxu0 %v1742
        %1866 = vmatpush.bf16.msra.mxu0 %v1740
        %1867 = vmatpush.bf16.msra.mxu0 %v1738
        %1868 = vmatpush.bf16.msra.mxu0 %v1736
        %1869 = vmatpush.bf16.msra.mxu0 %v1734
        %1870 = vmatmul.bf16.gmra.mxu0 %v1505
        %v1871 = vpop.f32.mrf.mxu0
        %v1872 = vadd.f32 %v1494, %v1871
        %v1873 = vpop.f32.mrf.mxu0
        %v1874 = vadd.f32 %v1494, %v1873
        %1875 = vdwg.mxu0
        %1876 = vmatpush.bf16.msra.mxu0 %v1764
        %1877 = vmatpush.bf16.msra.mxu0 %v1762
        %1878 = vmatpush.bf16.msra.mxu0 %v1760
        %1879 = vmatpush.bf16.msra.mxu0 %v1758
        %1880 = vmatpush.bf16.msra.mxu0 %v1756
        %1881 = vmatpush.bf16.msra.mxu0 %v1754
        %1882 = vmatpush.bf16.msra.mxu0 %v1752
        %1883 = vmatpush.bf16.msra.mxu0 %v1750
        %1884 = vmatmul.bf16.gmra.mxu0 %v1513
        %v1885 = vpop.f32.mrf.mxu0
        %v1886 = vadd.f32 %v1872, %v1885
        %v1887 = vpop.f32.mrf.mxu0
        %v1888 = vadd.f32 %v1874, %v1887
        %1889 = vdwg.mxu0
        %1890 = vmatpush.bf16.msra.mxu0 %v1780
        %1891 = vmatpush.bf16.msra.mxu0 %v1778
        %1892 = vmatpush.bf16.msra.mxu0 %v1776
        %1893 = vmatpush.bf16.msra.mxu0 %v1774
        %1894 = vmatpush.bf16.msra.mxu0 %v1772
        %1895 = vmatpush.bf16.msra.mxu0 %v1770
        %1896 = vmatpush.bf16.msra.mxu0 %v1768
        %1897 = vmatpush.bf16.msra.mxu0 %v1766
        %1898 = vmatmul.bf16.gmra.mxu0 %v1525
        %v1899 = vpop.f32.mrf.mxu0
        %v1900 = vadd.f32 %v1886, %v1899
        %v1901 = vpop.f32.mrf.mxu0
        %v1902 = vadd.f32 %v1888, %v1901
        %1903 = vdwg.mxu0
        %1904 = vmatpush.bf16.msra.mxu0 %v1796
        %1905 = vmatpush.bf16.msra.mxu0 %v1794
        %1906 = vmatpush.bf16.msra.mxu0 %v1792
        %1907 = vmatpush.bf16.msra.mxu0 %v1790
        %1908 = vmatpush.bf16.msra.mxu0 %v1788
        %1909 = vmatpush.bf16.msra.mxu0 %v1786
        %1910 = vmatpush.bf16.msra.mxu0 %v1784
        %1911 = vmatpush.bf16.msra.mxu0 %v1782
        %1912 = vmatmul.bf16.gmra.mxu0 %v1537
        %v1913 = vpop.f32.mrf.mxu0
        %v1914 = vadd.f32 %v1900, %v1913
        %v1915 = vpop.f32.mrf.mxu0
        %v1916 = vadd.f32 %v1902, %v1915
        %1917 = vdwg.mxu0
        %1918 = vmatpush.bf16.msra.mxu0 %v1749
        %1919 = vmatpush.bf16.msra.mxu0 %v1747
        %1920 = vmatpush.bf16.msra.mxu0 %v1745
        %1921 = vmatpush.bf16.msra.mxu0 %v1743
        %1922 = vmatpush.bf16.msra.mxu0 %v1741
        %1923 = vmatpush.bf16.msra.mxu0 %v1739
        %1924 = vmatpush.bf16.msra.mxu0 %v1737
        %1925 = vmatpush.bf16.msra.mxu0 %v1735
        %1926 = vmatmul.bf16.gmra.mxu0 %v1505
        %v1927 = vpop.f32.mrf.mxu0
        %v1928 = vadd.f32 %v1495, %v1927
        %v1929 = vpop.f32.mrf.mxu0
        %v1930 = vadd.f32 %v1495, %v1929
        %1931 = vdwg.mxu0
        %1932 = vmatpush.bf16.msra.mxu0 %v1765
        %1933 = vmatpush.bf16.msra.mxu0 %v1763
        %1934 = vmatpush.bf16.msra.mxu0 %v1761
        %1935 = vmatpush.bf16.msra.mxu0 %v1759
        %1936 = vmatpush.bf16.msra.mxu0 %v1757
        %1937 = vmatpush.bf16.msra.mxu0 %v1755
        %1938 = vmatpush.bf16.msra.mxu0 %v1753
        %1939 = vmatpush.bf16.msra.mxu0 %v1751
        %1940 = vmatmul.bf16.gmra.mxu0 %v1513
        %v1941 = vpop.f32.mrf.mxu0
        %v1942 = vadd.f32 %v1928, %v1941
        %v1943 = vpop.f32.mrf.mxu0
        %v1944 = vadd.f32 %v1930, %v1943
        %1945 = vdwg.mxu0
        %1946 = vmatpush.bf16.msra.mxu0 %v1781
        %1947 = vmatpush.bf16.msra.mxu0 %v1779
        %1948 = vmatpush.bf16.msra.mxu0 %v1777
        %1949 = vmatpush.bf16.msra.mxu0 %v1775
        %1950 = vmatpush.bf16.msra.mxu0 %v1773
        %1951 = vmatpush.bf16.msra.mxu0 %v1771
        %1952 = vmatpush.bf16.msra.mxu0 %v1769
        %1953 = vmatpush.bf16.msra.mxu0 %v1767
        %1954 = vmatmul.bf16.gmra.mxu0 %v1525
        %v1955 = vpop.f32.mrf.mxu0
        %v1956 = vadd.f32 %v1942, %v1955
        %v1957 = vpop.f32.mrf.mxu0
        %v1958 = vadd.f32 %v1944, %v1957
        %1959 = vdwg.mxu0
        %1960 = vmatpush.bf16.msra.mxu0 %v1797
        %1961 = vmatpush.bf16.msra.mxu0 %v1795
        %1962 = vmatpush.bf16.msra.mxu0 %v1793
        %1963 = vmatpush.bf16.msra.mxu0 %v1791
        %1964 = vmatpush.bf16.msra.mxu0 %v1789
        %1965 = vmatpush.bf16.msra.mxu0 %v1787
        %1966 = vmatpush.bf16.msra.mxu0 %v1785
        %1967 = vmatpush.bf16.msra.mxu0 %v1783
        %1968 = vmatmul.bf16.gmra.mxu0 %v1537
        %v1969 = vpop.f32.mrf.mxu0
        %v1970 = vadd.f32 %v1956, %v1969
        %v1971 = vpop.f32.mrf.mxu0
        %v1972 = vadd.f32 %v1958, %v1971
        %1973 = vdwg.mxu0
        %vm1974 = vcmp.ge.f32.partialorder %v1914, 0.0
        %vm1975 = vcmp.ge.f32.partialorder %v1970, 0.0
        %vm1976 = vcmp.ge.f32.partialorder %v1916, 0.0
        %vm1977 = vcmp.ge.f32.partialorder %v1972, 0.0
        %v1978 = vmul.f32 %v1914, 0.2
        %v1979 = vmul.f32 %v1970, 0.2
        %v1980 = vmul.f32 %v1916, 0.2
        %v1981 = vmul.f32 %v1972, 0.2
        %v1982 = vsel %vm1974, %v1914, %v1978
        %v1983 = vsel %vm1975, %v1970, %v1979
        %v1984 = vsel %vm1976, %v1916, %v1980
        %v1985 = vsel %vm1977, %v1972, %v1981
        %s1986 = scalar_lea.vmem %s295, 32
        %1987 = vst [vmem:[%s1986] sm:$0xff] %v1982
        %1988 = vst [vmem:[%s1986 + $0x8] sm:$0xff] %v1983
        %1989 = vst [vmem:[%s1986 + $0x10] sm:$0xff] %v1984
        %1990 = vst [vmem:[%s1986 + $0x18] sm:$0xff] %v1985
        %p1991 = scmp.lt.s32.totalorder %s19, 1
        %s1992 = scalar_select %p1991, %s19, 1
        %s1993 = smul.addr %s1992, 8
        %s1994 = smul.addr %s1993, 8
        %s1995 = scalar_lea.vmem %s7, %s1994
        // Predicated region
        $region53: #{_lambda_.1} parent=47 // pred_check
          %p1996 = pneg %p189
        $region54: #{_lambda_.1} parent=47 // pred_check_branch
          %1998 = sbr.rel (%p1996) target = $region56
        $region55: #{_lambda_.1} parent=47 // pred_region
          _
        $region56: #{_lambda_.1} parent=47 // pred_fallthru
          _
      $region48: #{_lambda_.1} parent=5 // pred_fallthru
        _
      %p1999 = scmp.le.s32.totalorder 2, %s14
      // Predicated region
      $region57: #{_lambda_.1} parent=5 // pred_check
        %p2000 = pneg %p1999
      $region58: #{_lambda_.1} parent=5 // pred_check_branch
        %2002 = sbr.rel (%p2000) target = $region60
      $region59: #{_lambda_.1} parent=5 // pred_region
        %s2003 = ssub.s32 %s14, 2
        // Predicated region
        $region61: #{_lambda_.1} parent=59 // pred_check
          %p2004 = pneg %p195
        $region62: #{_lambda_.1} parent=59 // pred_check_branch
          %2006 = sbr.rel (%p2004) target = $region64
        $region63: #{_lambda_.1} parent=59 // pred_region
          %p2007 = scmp.lt.s32.totalorder %s20, 1
          %s2008 = scalar_select %p2007, %s20, 1
          %s2009 = smul.addr %s2008, 8
          %s2010 = smul.addr %s2009, 8
          %s2011 = scalar_lea.vmem %s7, %s2010
        $region64: #{_lambda_.1} parent=59 // pred_fallthru
          _
      $region60: #{_lambda_.1} parent=5 // pred_fallthru
        _
    $region6: #{_lambda_.1} parent=1 // loop_footer
      %s18 = sadd.s32 1, %s14
    $region7: #{_lambda_.1} parent=1 // loop_footer_branch
      %13 = sbr.rel target = $region3
    $region8: #{_lambda_.1} parent=1 // loop_exit
      _
    %2012 = vsyncpa [#allocation5], 1
    %s2013 = scalar_lea.sflag [#allocation5], 1
    %2014 = vsyncpa %s2013, 1

</llo_original>
